<compile_context>
chip_gen: v7x
topology: tpu7x:2x2x1
jax: 0.10.0
libtpu: 0.0.40
codegen_flags: <defaults>
</compile_context>

<pallas_src>
import functools

import jax
import jax.numpy as jnp
from jax import lax
from jax.experimental import pallas as pl
from jax.experimental.pallas import tpu as pltpu

_INV_LN2 = 1.4426950408889634  # 1 / ln(2):  log2(x) = ln(x) * _INV_LN2


def _fast_recip(x):
    """EUP approximate reciprocal + one Newton-Raphson refinement step."""
    r = pl.reciprocal(x, approx=True)
    return r * (2.0 - x * r)


# ----------------------------------------------------------------------------
# Pallas kernel
# ----------------------------------------------------------------------------
def _make_dgc_kernel(n: int, k: float, penalize: bool, normalize: bool,
                     eps: float = 1e-8):
    """Build a DGC-loss kernel specialized for batch size `n`."""
    inv_2k = 0.5 / k

    def kernel(x_ref, tcol_ref, trow_ref, out_ref, smk_ref, rel_ref):
        # ------------------ loop-invariant precompute (once) ----------------
        x = x_ref[...]                                              # (N, D) f32
        sumsq = jnp.sum(x * x, axis=1, keepdims=True)               # (N, 1)
        xn = x * lax.rsqrt(jnp.maximum(sumsq, eps * eps))           # row-normalize
        # cosine similarity, pre-scaled by 1/(2k) for the tanh-sigmoid.
        sm = lax.dot_general(xn, xn, (((1,), (1,)), ((), ())),
                             preferred_element_type=jnp.float32)    # (N, N) f32
        smk_ref[...] = sm * inv_2k

        # relevance[i, j] = clamp(5 - |t_i - t_j|, 0, 5)  (symmetric)
        rel = jnp.clip(5.0 - jnp.abs(tcol_ref[...] - trow_ref[...]), 0.0, 5.0)
        if penalize:
            rel = jnp.exp2(rel) - 1.0
        rel_ref[...] = rel

        lane_idx = lax.broadcasted_iota(jnp.int32, (1, n), 1)       # a on lanes
        sub_idx = lax.broadcasted_iota(jnp.int32, (n, 1), 0)        # b / a' on sublanes
        sub_lt_lane = sub_idx < lane_idx                            # a' < a (tie break)

        def body(i, acc):
            lane_eq = lane_idx == i
            lane_ne = lane_idx != i
            sub_ne = sub_idx != i

            S = smk_ref[...]                                        # (N, N)
            R = rel_ref[...]                                        # (N, N)
            s_row = smk_ref[pl.ds(i, 1), :]                         # (1, N): smk[i, a]
            r_row = rel_ref[pl.ds(i, 1), :]                         # (1, N): rel[i, a]
            # column i == row i (symmetric matrices) laid out along sublanes,
            # extracted with a masked lane-reduce (no transpose, no matmul).
            s_col = jnp.sum(jnp.where(lane_eq, S, 0.0), axis=1, keepdims=True)
            r_col = jnp.sum(jnp.where(lane_eq, R, 0.0), axis=1, keepdims=True)

            # indicator[a] = sum_{b != i} sigmoid((sm[i,b] - sm[i,a]) / k) + 0.5
            diff = s_col - s_row                                    # (N,N): already / (2k)
            sig = 0.5 + 0.5 * jnp.tanh(diff)
            sig = jnp.where(sub_ne, sig, 0.0)                       # drop b == i
            ind = jnp.sum(sig, axis=0, keepdims=True) + 0.5         # (1, N)

            log_ind = jnp.log(ind + 1.0) * _INV_LN2                 # log2(ind + 1)
            dcg_t = jnp.where(lane_ne, r_row * _fast_recip(log_ind), 0.0)
            dcg_i = jnp.sum(dcg_t, axis=1, keepdims=True)           # (1, 1)

            if normalize:
                # IDCG without a sort: 0-based descending rank of rel[i,a]
                # among {a' != i}, ties broken by index.
                greater = r_col > r_row
                tie = jnp.logical_and(r_col == r_row, sub_lt_lane)
                cond = jnp.logical_and(jnp.logical_or(greater, tie), sub_ne)
                rank = jnp.sum(cond.astype(jnp.float32), axis=0, keepdims=True)
                log_rank = jnp.log(rank + 2.0) * _INV_LN2           # log2(rank + 2)
                idcg_t = jnp.where(lane_ne, r_row * _fast_recip(log_rank), 0.0)
                idcg_i = jnp.sum(idcg_t, axis=1, keepdims=True)     # (1, 1)
                # exact divide for the ratio; tiny clamp only guards the
                # degenerate all-zero-relevance row (reference would give inf).
                return acc + dcg_i / jnp.maximum(idcg_i, 1e-30)
            return acc + dcg_i

        acc = lax.fori_loop(0, n, body, jnp.zeros((1, 1), jnp.float32),
                            unroll=(n <= 16))

        if normalize:
            out_ref[...] = 1.0 - acc / float(n)       # 1 - mean(ndcg)
        else:
            out_ref[...] = -acc / float(n)            # -mean(dcg)

    return kernel


# ----------------------------------------------------------------------------
# Wrapper
# ----------------------------------------------------------------------------
@functools.partial(jax.jit, static_argnames=("k", "penalize", "normalize"))
def dgc_loss_pallas(x, target, k: float = 1e-3, penalize: bool = False,
                    normalize: bool = True):
    n, d = x.shape
    x = x.astype(jnp.float32)
    t = target.astype(jnp.float32)
    t_col = t.reshape(n, 1)
    t_row = t.reshape(1, n)

    kernel = _make_dgc_kernel(n, float(k), bool(penalize), bool(normalize))

    out = pl.pallas_call(
        kernel,
        out_shape=jax.ShapeDtypeStruct((1, 1), jnp.float32),
        grid=(1,),
        in_specs=[
            pl.BlockSpec((n, d), lambda i: (0, 0)),
            pl.BlockSpec((n, 1), lambda i: (0, 0)),
            pl.BlockSpec((1, n), lambda i: (0, 0)),
        ],
        out_specs=pl.BlockSpec((1, 1), lambda i: (0, 0)),
        scratch_shapes=[
            pltpu.VMEM((n, n), jnp.float32),   # sm * 1/(2k)
            pltpu.VMEM((n, n), jnp.float32),   # relevance matrix
        ],
        compiler_params=pltpu.CompilerParams(
            dimension_semantics=("arbitrary",)),
    )(x, t_col, t_row)
    return out[0, 0]


# ----------------------------------------------------------------------------
# Pure-JAX reference (mirrors the PyTorch code), used only for verification
# ----------------------------------------------------------------------------
def dgc_loss_ref(x, t, k=1e-3, penalize=False, normalize=True, eps=1e-8):
    n = x.shape[0]
    x = jnp.asarray(x, jnp.float32)
    t = jnp.asarray(t, jnp.float32)
    dot = jnp.matmul(x, x.T, precision=lax.Precision.HIGHEST)
    nrm = jnp.sqrt(jnp.sum(x * x, axis=1))
    sm = dot / jnp.maximum(jnp.outer(nrm, nrm), eps)
    mask = ~jnp.eye(n, dtype=bool)
    ranking = sm[mask].reshape(n, n - 1)
    gt = jnp.abs(t[None, :] - t[:, None]).astype(jnp.float32)
    gt = gt[mask].reshape(n, n - 1)
    ind = ranking[:, None, :] - ranking[:, :, None]
    ind = 1.0 / (1.0 + jnp.exp(-ind / k))
    ind = ind.sum(-1) + 0.5
    rel = jnp.clip(5.0 - gt, 0.0, 5.0)
    if penalize:
        rel = jnp.exp2(rel) - 1.0
    dcg = jnp.sum(rel / jnp.log2(ind + 1.0), axis=1)
    if not normalize:
        return -dcg.mean()
    rel_sorted = jnp.sort(rel, axis=-1)[:, ::-1]
    pos = jnp.arange(n - 1, dtype=jnp.float32)
    idcg = jnp.sum(rel_sorted / jnp.log2(pos + 2.0), axis=-1)
    return 1.0 - (dcg / idcg).mean()


# ----------------------------------------------------------------------------
if __name__ == "__main__":
    N, D = 8, 32
    key = jax.random.PRNGKey(0)
    kx, kt = jax.random.split(key)
    x = jax.random.normal(kx, (N, D), dtype=jnp.float32)
    # integer-valued class labels in [0, 5), stored as float (as torch does
    # after .float()); guarantees relevance > 0 so IDCG is nonzero.
    target = jax.random.randint(kt, (N,), 0, 5).astype(jnp.float32)

    loss = dgc_loss_pallas(x, target)          # defaults: k=1e-3, normalize=True
    loss = jax.block_until_ready(loss)

    ref = dgc_loss_ref(x, target)
    assert jnp.isfinite(loss), "kernel produced non-finite loss"
    assert abs(float(loss) - float(ref)) < 5e-3, (float(loss), float(ref))

    print("KERNEL_OK")
</pallas_src>

<mosaic_0001>
module attributes {stable_mosaic.version = 11 : i64} {
  func.func @kernel(%arg0: i32, %arg1: memref<8x32xf32, #tpu.memory_space<vmem>>, %arg2: memref<8x1xf32, #tpu.memory_space<vmem>>, %arg3: memref<1x8xf32, #tpu.memory_space<vmem>>, %arg4: memref<1x1xf32, #tpu.memory_space<vmem>>, %arg5: memref<8x8xf32, #tpu.memory_space<vmem>>, %arg6: memref<8x8xf32, #tpu.memory_space<vmem>>) attributes {dimension_semantics = [#tpu.dimension_semantics<arbitrary>], iteration_bounds = array<i64: 1>, scalar_prefetch = 0 : i64, scratch_operands = 2 : i64, tpu.core_type = #tpu.core_type<tc>, window_params = [{pipeline_mode = #tpu.pipeline_mode<synchronous>, transform_indices = @transform_0, window_bounds = array<i64: 8, 32>}, {pipeline_mode = #tpu.pipeline_mode<synchronous>, transform_indices = @transform_1, window_bounds = array<i64: 8, 1>}, {pipeline_mode = #tpu.pipeline_mode<synchronous>, transform_indices = @transform_2, window_bounds = array<i64: 1, 8>}, {pipeline_mode = #tpu.pipeline_mode<synchronous>, transform_indices = @transform_3, window_bounds = array<i64: 1, 1>}]} {
    %c0 = arith.constant 0 : index
    %c0_0 = arith.constant 0 : index
    %0 = vector.load %arg1[%c0, %c0_0] : memref<8x32xf32, #tpu.memory_space<vmem>>, vector<8x32xf32>
    %1 = arith.mulf %0, %0 : vector<8x32xf32>
    %cst = arith.constant dense<0.000000e+00> : vector<8xf32>
    %2 = vector.multi_reduction <add>, %1, %cst [1] : vector<8x32xf32> to vector<8xf32>
    %3 = vector.shape_cast %2 : vector<8xf32> to vector<8x1xf32>
    %cst_1 = arith.constant 1.000000e-16 : f32
    %4 = vector.broadcast %cst_1 : f32 to vector<8x1xf32>
    %5 = arith.maximumf %3, %4 : vector<8x1xf32>
    %6 = math.rsqrt %5 : vector<8x1xf32>
    %7 = vector.broadcast %6 : vector<8x1xf32> to vector<8x32xf32>
    %8 = arith.mulf %0, %7 : vector<8x32xf32>
    %cst_2 = arith.constant dense<0.000000e+00> : vector<8x8xf32>
    %9 = tpu.matmul %8, %8, %cst_2 {dimension_numbers = #tpu.dot_dimension_numbers<[1], [1], [0], [0], [0, 0, 1, 0], [], []>} : vector<8x32xf32>, vector<8x32xf32>, vector<8x8xf32> -> vector<8x8xf32>
    %cst_3 = arith.constant 5.000000e+02 : f32
    %10 = vector.broadcast %cst_3 : f32 to vector<8x8xf32>
    %11 = arith.mulf %9, %10 : vector<8x8xf32>
    %c0_4 = arith.constant 0 : index
    %c0_5 = arith.constant 0 : index
    %12 = vector.load %arg5[%c0_4, %c0_5] : memref<8x8xf32, #tpu.memory_space<vmem>>, vector<8x8xf32>
    tpu.vector_store %arg5[%c0_4, %c0_5], %11 {strides = array<i32>} : memref<8x8xf32, #tpu.memory_space<vmem>>, vector<8x8xf32>,
    %c0_6 = arith.constant 0 : index
    %c0_7 = arith.constant 0 : index
    %13 = vector.load %arg2[%c0_6, %c0_7] : memref<8x1xf32, #tpu.memory_space<vmem>>, vector<8x1xf32>
    %c0_8 = arith.constant 0 : index
    %c0_9 = arith.constant 0 : index
    %14 = vector.load %arg3[%c0_8, %c0_9] : memref<1x8xf32, #tpu.memory_space<vmem>>, vector<1x8xf32>
    %15 = vector.broadcast %13 : vector<8x1xf32> to vector<8x8xf32>
    %16 = vector.broadcast %14 : vector<1x8xf32> to vector<8x8xf32>
    %17 = arith.subf %15, %16 : vector<8x8xf32>
    %18 = math.absf %17 : vector<8x8xf32>
    %cst_10 = arith.constant 5.000000e+00 : f32
    %19 = vector.broadcast %cst_10 : f32 to vector<8x8xf32>
    %20 = arith.subf %19, %18 : vector<8x8xf32>
    %cst_11 = arith.constant 0.000000e+00 : f32
    %cst_12 = arith.constant 5.000000e+00 : f32
    %21 = vector.broadcast %cst_11 : f32 to vector<8x8xf32>
    %22 = arith.maximumf %21, %20 : vector<8x8xf32>
    %23 = vector.broadcast %cst_12 : f32 to vector<8x8xf32>
    %24 = arith.minimumf %23, %22 : vector<8x8xf32>
    %c0_13 = arith.constant 0 : index
    %c0_14 = arith.constant 0 : index
    %25 = vector.load %arg6[%c0_13, %c0_14] : memref<8x8xf32, #tpu.memory_space<vmem>>, vector<8x8xf32>
    tpu.vector_store %arg6[%c0_13, %c0_14], %24 {strides = array<i32>} : memref<8x8xf32, #tpu.memory_space<vmem>>, vector<8x8xf32>,
    %26 = tpu.iota {dimensions = array<i32: 1>} : vector<1x8xi32>
    %27 = tpu.iota {dimensions = array<i32: 0>} : vector<8x1xi32>
    %28 = vector.broadcast %27 : vector<8x1xi32> to vector<8x8xi32>
    %29 = vector.broadcast %26 : vector<1x8xi32> to vector<8x8xi32>
    %30 = arith.cmpi slt, %28, %29 : vector<8x8xi32>
    %cst_15 = arith.constant 0.000000e+00 : f32
    %31 = vector.broadcast %cst_15 : f32 to vector<1x1xf32>
    %c0_i32 = arith.constant 0 : i32
    %32 = vector.broadcast %c0_i32 : i32 to vector<1x8xi32>
    %33 = arith.cmpi eq, %26, %32 : vector<1x8xi32>
    %34 = vector.broadcast %c0_i32 : i32 to vector<1x8xi32>
    %35 = arith.cmpi ne, %26, %34 : vector<1x8xi32>
    %36 = vector.broadcast %c0_i32 : i32 to vector<8x1xi32>
    %37 = arith.cmpi ne, %27, %36 : vector<8x1xi32>
    %c0_16 = arith.constant 0 : index
    %c0_17 = arith.constant 0 : index
    %38 = vector.load %arg5[%c0_16, %c0_17] : memref<8x8xf32, #tpu.memory_space<vmem>>, vector<8x8xf32>
    %c0_18 = arith.constant 0 : index
    %c0_19 = arith.constant 0 : index
    %39 = vector.load %arg6[%c0_18, %c0_19] : memref<8x8xf32, #tpu.memory_space<vmem>>, vector<8x8xf32>
    %40 = arith.index_cast %c0_i32 : i32 to index
    %c0_20 = arith.constant 0 : index
    %41 = vector.load %arg5[%40, %c0_20] : memref<8x8xf32, #tpu.memory_space<vmem>>, vector<1x8xf32>
    %42 = arith.index_cast %c0_i32 : i32 to index
    %c0_21 = arith.constant 0 : index
    %43 = vector.load %arg6[%42, %c0_21] : memref<8x8xf32, #tpu.memory_space<vmem>>, vector<1x8xf32>
    %cst_22 = arith.constant 0.000000e+00 : f32
    %44 = vector.shape_cast %33 : vector<1x8xi1> to vector<1x8xi1>
    %45 = vector.broadcast %44 : vector<1x8xi1> to vector<8x8xi1>
    %46 = vector.broadcast %cst_22 : f32 to vector<8x8xf32>
    %47 = arith.select %45, %38, %46 : vector<8x8xi1>, vector<8x8xf32>
    %cst_23 = arith.constant dense<0.000000e+00> : vector<8xf32>
    %48 = vector.multi_reduction <add>, %47, %cst_23 [1] : vector<8x8xf32> to vector<8xf32>
    %49 = vector.shape_cast %48 : vector<8xf32> to vector<8x1xf32>
    %cst_24 = arith.constant 0.000000e+00 : f32
    %50 = vector.shape_cast %33 : vector<1x8xi1> to vector<1x8xi1>
    %51 = vector.broadcast %50 : vector<1x8xi1> to vector<8x8xi1>
    %52 = vector.broadcast %cst_24 : f32 to vector<8x8xf32>
    %53 = arith.select %51, %39, %52 : vector<8x8xi1>, vector<8x8xf32>
    %cst_25 = arith.constant dense<0.000000e+00> : vector<8xf32>
    %54 = vector.multi_reduction <add>, %53, %cst_25 [1] : vector<8x8xf32> to vector<8xf32>
    %55 = vector.shape_cast %54 : vector<8xf32> to vector<8x1xf32>
    %56 = vector.broadcast %49 : vector<8x1xf32> to vector<8x8xf32>
    %57 = vector.broadcast %41 : vector<1x8xf32> to vector<8x8xf32>
    %58 = arith.subf %56, %57 : vector<8x8xf32>
    %59 = math.tanh %58 : vector<8x8xf32>
    %cst_26 = arith.constant 5.000000e-01 : f32
    %60 = vector.broadcast %cst_26 : f32 to vector<8x8xf32>
    %61 = arith.mulf %60, %59 : vector<8x8xf32>
    %cst_27 = arith.constant 5.000000e-01 : f32
    %62 = vector.broadcast %cst_27 : f32 to vector<8x8xf32>
    %63 = arith.addf %62, %61 : vector<8x8xf32>
    %cst_28 = arith.constant 0.000000e+00 : f32
    %64 = vector.shape_cast %37 : vector<8x1xi1> to vector<8x1xi1>
    %65 = vector.broadcast %64 : vector<8x1xi1> to vector<8x8xi1>
    %66 = vector.broadcast %cst_28 : f32 to vector<8x8xf32>
    %67 = arith.select %65, %63, %66 : vector<8x8xi1>, vector<8x8xf32>
    %cst_29 = arith.constant dense<0.000000e+00> : vector<8xf32>
    %68 = vector.multi_reduction <add>, %67, %cst_29 [0] : vector<8x8xf32> to vector<8xf32>
    %69 = vector.shape_cast %68 : vector<8xf32> to vector<1x8xf32>
    %cst_30 = arith.constant 5.000000e-01 : f32
    %70 = vector.broadcast %cst_30 : f32 to vector<1x8xf32>
    %71 = arith.addf %69, %70 : vector<1x8xf32>
    %cst_31 = arith.constant 1.000000e+00 : f32
    %72 = vector.broadcast %cst_31 : f32 to vector<1x8xf32>
    %73 = arith.addf %71, %72 : vector<1x8xf32>
    %74 = math.log %73 : vector<1x8xf32>
    %cst_32 = arith.constant 1.44269502 : f32
    %75 = vector.broadcast %cst_32 : f32 to vector<1x8xf32>
    %76 = arith.mulf %74, %75 : vector<1x8xf32>
    %77 = tpu.reciprocal %76 {approx = true} : vector<1x8xf32> -> vector<1x8xf32>
    %78 = arith.mulf %76, %77 : vector<1x8xf32>
    %cst_33 = arith.constant 2.000000e+00 : f32
    %79 = vector.broadcast %cst_33 : f32 to vector<1x8xf32>
    %80 = arith.subf %79, %78 : vector<1x8xf32>
    %81 = arith.mulf %77, %80 : vector<1x8xf32>
    %82 = arith.mulf %43, %81 : vector<1x8xf32>
    %cst_34 = arith.constant 0.000000e+00 : f32
    %83 = vector.broadcast %cst_34 : f32 to vector<1x8xf32>
    %84 = arith.select %35, %82, %83 : vector<1x8xi1>, vector<1x8xf32>
    %cst_35 = arith.constant dense<0.000000e+00> : vector<1xf32>
    %85 = vector.multi_reduction <add>, %84, %cst_35 [1] : vector<1x8xf32> to vector<1xf32>
    %86 = vector.shape_cast %85 : vector<1xf32> to vector<1x1xf32>
    %87 = vector.broadcast %55 : vector<8x1xf32> to vector<8x8xf32>
    %88 = vector.broadcast %43 : vector<1x8xf32> to vector<8x8xf32>
    %89 = arith.cmpf ogt, %87, %88 : vector<8x8xf32>
    %90 = vector.broadcast %55 : vector<8x1xf32> to vector<8x8xf32>
    %91 = vector.broadcast %43 : vector<1x8xf32> to vector<8x8xf32>
    %92 = arith.cmpf oeq, %90, %91 : vector<8x8xf32>
    %93 = arith.andi %92, %30 : vector<8x8xi1>
    %94 = arith.ori %89, %93 : vector<8x8xi1>
    %95 = vector.broadcast %37 : vector<8x1xi1> to vector<8x8xi1>
    %96 = arith.andi %94, %95 : vector<8x8xi1>
    %97 = arith.extui %96 : vector<8x8xi1> to vector<8x8xi32>
    %98 = arith.sitofp %97 : vector<8x8xi32> to vector<8x8xf32>
    %cst_36 = arith.constant dense<0.000000e+00> : vector<8xf32>
    %99 = vector.multi_reduction <add>, %98, %cst_36 [0] : vector<8x8xf32> to vector<8xf32>
    %100 = vector.shape_cast %99 : vector<8xf32> to vector<1x8xf32>
    %cst_37 = arith.constant 2.000000e+00 : f32
    %101 = vector.broadcast %cst_37 : f32 to vector<1x8xf32>
    %102 = arith.addf %100, %101 : vector<1x8xf32>
    %103 = math.log %102 : vector<1x8xf32>
    %cst_38 = arith.constant 1.44269502 : f32
    %104 = vector.broadcast %cst_38 : f32 to vector<1x8xf32>
    %105 = arith.mulf %103, %104 : vector<1x8xf32>
    %106 = tpu.reciprocal %105 {approx = true} : vector<1x8xf32> -> vector<1x8xf32>
    %107 = arith.mulf %105, %106 : vector<1x8xf32>
    %cst_39 = arith.constant 2.000000e+00 : f32
    %108 = vector.broadcast %cst_39 : f32 to vector<1x8xf32>
    %109 = arith.subf %108, %107 : vector<1x8xf32>
    %110 = arith.mulf %106, %109 : vector<1x8xf32>
    %111 = arith.mulf %43, %110 : vector<1x8xf32>
    %cst_40 = arith.constant 0.000000e+00 : f32
    %112 = vector.broadcast %cst_40 : f32 to vector<1x8xf32>
    %113 = arith.select %35, %111, %112 : vector<1x8xi1>, vector<1x8xf32>
    %cst_41 = arith.constant dense<0.000000e+00> : vector<1xf32>
    %114 = vector.multi_reduction <add>, %113, %cst_41 [1] : vector<1x8xf32> to vector<1xf32>
    %115 = vector.shape_cast %114 : vector<1xf32> to vector<1x1xf32>
    %cst_42 = arith.constant 1.000000e-30 : f32
    %116 = vector.broadcast %cst_42 : f32 to vector<1x1xf32>
    %117 = arith.maximumf %115, %116 : vector<1x1xf32>
    %118 = arith.divf %86, %117 : vector<1x1xf32>
    %119 = arith.addf %31, %118 : vector<1x1xf32>
    %c1_i32 = arith.constant 1 : i32
    %120 = vector.broadcast %c1_i32 : i32 to vector<1x8xi32>
    %121 = arith.cmpi eq, %26, %120 : vector<1x8xi32>
    %122 = vector.broadcast %c1_i32 : i32 to vector<1x8xi32>
    %123 = arith.cmpi ne, %26, %122 : vector<1x8xi32>
    %124 = vector.broadcast %c1_i32 : i32 to vector<8x1xi32>
    %125 = arith.cmpi ne, %27, %124 : vector<8x1xi32>
    %c0_43 = arith.constant 0 : index
    %c0_44 = arith.constant 0 : index
    %126 = vector.load %arg5[%c0_43, %c0_44] : memref<8x8xf32, #tpu.memory_space<vmem>>, vector<8x8xf32>
    %c0_45 = arith.constant 0 : index
    %c0_46 = arith.constant 0 : index
    %127 = vector.load %arg6[%c0_45, %c0_46] : memref<8x8xf32, #tpu.memory_space<vmem>>, vector<8x8xf32>
    %128 = arith.index_cast %c1_i32 : i32 to index
    %c0_47 = arith.constant 0 : index
    %129 = vector.load %arg5[%128, %c0_47] : memref<8x8xf32, #tpu.memory_space<vmem>>, vector<1x8xf32>
    %130 = arith.index_cast %c1_i32 : i32 to index
    %c0_48 = arith.constant 0 : index
    %131 = vector.load %arg6[%130, %c0_48] : memref<8x8xf32, #tpu.memory_space<vmem>>, vector<1x8xf32>
    %cst_49 = arith.constant 0.000000e+00 : f32
    %132 = vector.shape_cast %121 : vector<1x8xi1> to vector<1x8xi1>
    %133 = vector.broadcast %132 : vector<1x8xi1> to vector<8x8xi1>
    %134 = vector.broadcast %cst_49 : f32 to vector<8x8xf32>
    %135 = arith.select %133, %126, %134 : vector<8x8xi1>, vector<8x8xf32>
    %cst_50 = arith.constant dense<0.000000e+00> : vector<8xf32>
    %136 = vector.multi_reduction <add>, %135, %cst_50 [1] : vector<8x8xf32> to vector<8xf32>
    %137 = vector.shape_cast %136 : vector<8xf32> to vector<8x1xf32>
    %cst_51 = arith.constant 0.000000e+00 : f32
    %138 = vector.shape_cast %121 : vector<1x8xi1> to vector<1x8xi1>
    %139 = vector.broadcast %138 : vector<1x8xi1> to vector<8x8xi1>
    %140 = vector.broadcast %cst_51 : f32 to vector<8x8xf32>
    %141 = arith.select %139, %127, %140 : vector<8x8xi1>, vector<8x8xf32>
    %cst_52 = arith.constant dense<0.000000e+00> : vector<8xf32>
    %142 = vector.multi_reduction <add>, %141, %cst_52 [1] : vector<8x8xf32> to vector<8xf32>
    %143 = vector.shape_cast %142 : vector<8xf32> to vector<8x1xf32>
    %144 = vector.broadcast %137 : vector<8x1xf32> to vector<8x8xf32>
    %145 = vector.broadcast %129 : vector<1x8xf32> to vector<8x8xf32>
    %146 = arith.subf %144, %145 : vector<8x8xf32>
    %147 = math.tanh %146 : vector<8x8xf32>
    %cst_53 = arith.constant 5.000000e-01 : f32
    %148 = vector.broadcast %cst_53 : f32 to vector<8x8xf32>
    %149 = arith.mulf %148, %147 : vector<8x8xf32>
    %cst_54 = arith.constant 5.000000e-01 : f32
    %150 = vector.broadcast %cst_54 : f32 to vector<8x8xf32>
    %151 = arith.addf %150, %149 : vector<8x8xf32>
    %cst_55 = arith.constant 0.000000e+00 : f32
    %152 = vector.shape_cast %125 : vector<8x1xi1> to vector<8x1xi1>
    %153 = vector.broadcast %152 : vector<8x1xi1> to vector<8x8xi1>
    %154 = vector.broadcast %cst_55 : f32 to vector<8x8xf32>
    %155 = arith.select %153, %151, %154 : vector<8x8xi1>, vector<8x8xf32>
    %cst_56 = arith.constant dense<0.000000e+00> : vector<8xf32>
    %156 = vector.multi_reduction <add>, %155, %cst_56 [0] : vector<8x8xf32> to vector<8xf32>
    %157 = vector.shape_cast %156 : vector<8xf32> to vector<1x8xf32>
    %cst_57 = arith.constant 5.000000e-01 : f32
    %158 = vector.broadcast %cst_57 : f32 to vector<1x8xf32>
    %159 = arith.addf %157, %158 : vector<1x8xf32>
    %cst_58 = arith.constant 1.000000e+00 : f32
    %160 = vector.broadcast %cst_58 : f32 to vector<1x8xf32>
    %161 = arith.addf %159, %160 : vector<1x8xf32>
    %162 = math.log %161 : vector<1x8xf32>
    %cst_59 = arith.constant 1.44269502 : f32
    %163 = vector.broadcast %cst_59 : f32 to vector<1x8xf32>
    %164 = arith.mulf %162, %163 : vector<1x8xf32>
    %165 = tpu.reciprocal %164 {approx = true} : vector<1x8xf32> -> vector<1x8xf32>
    %166 = arith.mulf %164, %165 : vector<1x8xf32>
    %cst_60 = arith.constant 2.000000e+00 : f32
    %167 = vector.broadcast %cst_60 : f32 to vector<1x8xf32>
    %168 = arith.subf %167, %166 : vector<1x8xf32>
    %169 = arith.mulf %165, %168 : vector<1x8xf32>
    %170 = arith.mulf %131, %169 : vector<1x8xf32>
    %cst_61 = arith.constant 0.000000e+00 : f32
    %171 = vector.broadcast %cst_61 : f32 to vector<1x8xf32>
    %172 = arith.select %123, %170, %171 : vector<1x8xi1>, vector<1x8xf32>
    %cst_62 = arith.constant dense<0.000000e+00> : vector<1xf32>
    %173 = vector.multi_reduction <add>, %172, %cst_62 [1] : vector<1x8xf32> to vector<1xf32>
    %174 = vector.shape_cast %173 : vector<1xf32> to vector<1x1xf32>
    %175 = vector.broadcast %143 : vector<8x1xf32> to vector<8x8xf32>
    %176 = vector.broadcast %131 : vector<1x8xf32> to vector<8x8xf32>
    %177 = arith.cmpf ogt, %175, %176 : vector<8x8xf32>
    %178 = vector.broadcast %143 : vector<8x1xf32> to vector<8x8xf32>
    %179 = vector.broadcast %131 : vector<1x8xf32> to vector<8x8xf32>
    %180 = arith.cmpf oeq, %178, %179 : vector<8x8xf32>
    %181 = arith.andi %180, %30 : vector<8x8xi1>
    %182 = arith.ori %177, %181 : vector<8x8xi1>
    %183 = vector.broadcast %125 : vector<8x1xi1> to vector<8x8xi1>
    %184 = arith.andi %182, %183 : vector<8x8xi1>
    %185 = arith.extui %184 : vector<8x8xi1> to vector<8x8xi32>
    %186 = arith.sitofp %185 : vector<8x8xi32> to vector<8x8xf32>
    %cst_63 = arith.constant dense<0.000000e+00> : vector<8xf32>
    %187 = vector.multi_reduction <add>, %186, %cst_63 [0] : vector<8x8xf32> to vector<8xf32>
    %188 = vector.shape_cast %187 : vector<8xf32> to vector<1x8xf32>
    %cst_64 = arith.constant 2.000000e+00 : f32
    %189 = vector.broadcast %cst_64 : f32 to vector<1x8xf32>
    %190 = arith.addf %188, %189 : vector<1x8xf32>
    %191 = math.log %190 : vector<1x8xf32>
    %cst_65 = arith.constant 1.44269502 : f32
    %192 = vector.broadcast %cst_65 : f32 to vector<1x8xf32>
    %193 = arith.mulf %191, %192 : vector<1x8xf32>
    %194 = tpu.reciprocal %193 {approx = true} : vector<1x8xf32> -> vector<1x8xf32>
    %195 = arith.mulf %193, %194 : vector<1x8xf32>
    %cst_66 = arith.constant 2.000000e+00 : f32
    %196 = vector.broadcast %cst_66 : f32 to vector<1x8xf32>
    %197 = arith.subf %196, %195 : vector<1x8xf32>
    %198 = arith.mulf %194, %197 : vector<1x8xf32>
    %199 = arith.mulf %131, %198 : vector<1x8xf32>
    %cst_67 = arith.constant 0.000000e+00 : f32
    %200 = vector.broadcast %cst_67 : f32 to vector<1x8xf32>
    %201 = arith.select %123, %199, %200 : vector<1x8xi1>, vector<1x8xf32>
    %cst_68 = arith.constant dense<0.000000e+00> : vector<1xf32>
    %202 = vector.multi_reduction <add>, %201, %cst_68 [1] : vector<1x8xf32> to vector<1xf32>
    %203 = vector.shape_cast %202 : vector<1xf32> to vector<1x1xf32>
    %cst_69 = arith.constant 1.000000e-30 : f32
    %204 = vector.broadcast %cst_69 : f32 to vector<1x1xf32>
    %205 = arith.maximumf %203, %204 : vector<1x1xf32>
    %206 = arith.divf %174, %205 : vector<1x1xf32>
    %207 = arith.addf %119, %206 : vector<1x1xf32>
    %c2_i32 = arith.constant 2 : i32
    %208 = vector.broadcast %c2_i32 : i32 to vector<1x8xi32>
    %209 = arith.cmpi eq, %26, %208 : vector<1x8xi32>
    %210 = vector.broadcast %c2_i32 : i32 to vector<1x8xi32>
    %211 = arith.cmpi ne, %26, %210 : vector<1x8xi32>
    %212 = vector.broadcast %c2_i32 : i32 to vector<8x1xi32>
    %213 = arith.cmpi ne, %27, %212 : vector<8x1xi32>
    %c0_70 = arith.constant 0 : index
    %c0_71 = arith.constant 0 : index
    %214 = vector.load %arg5[%c0_70, %c0_71] : memref<8x8xf32, #tpu.memory_space<vmem>>, vector<8x8xf32>
    %c0_72 = arith.constant 0 : index
    %c0_73 = arith.constant 0 : index
    %215 = vector.load %arg6[%c0_72, %c0_73] : memref<8x8xf32, #tpu.memory_space<vmem>>, vector<8x8xf32>
    %216 = arith.index_cast %c2_i32 : i32 to index
    %c0_74 = arith.constant 0 : index
    %217 = vector.load %arg5[%216, %c0_74] : memref<8x8xf32, #tpu.memory_space<vmem>>, vector<1x8xf32>
    %218 = arith.index_cast %c2_i32 : i32 to index
    %c0_75 = arith.constant 0 : index
    %219 = vector.load %arg6[%218, %c0_75] : memref<8x8xf32, #tpu.memory_space<vmem>>, vector<1x8xf32>
    %cst_76 = arith.constant 0.000000e+00 : f32
    %220 = vector.shape_cast %209 : vector<1x8xi1> to vector<1x8xi1>
    %221 = vector.broadcast %220 : vector<1x8xi1> to vector<8x8xi1>
    %222 = vector.broadcast %cst_76 : f32 to vector<8x8xf32>
    %223 = arith.select %221, %214, %222 : vector<8x8xi1>, vector<8x8xf32>
    %cst_77 = arith.constant dense<0.000000e+00> : vector<8xf32>
    %224 = vector.multi_reduction <add>, %223, %cst_77 [1] : vector<8x8xf32> to vector<8xf32>
    %225 = vector.shape_cast %224 : vector<8xf32> to vector<8x1xf32>
    %cst_78 = arith.constant 0.000000e+00 : f32
    %226 = vector.shape_cast %209 : vector<1x8xi1> to vector<1x8xi1>
    %227 = vector.broadcast %226 : vector<1x8xi1> to vector<8x8xi1>
    %228 = vector.broadcast %cst_78 : f32 to vector<8x8xf32>
    %229 = arith.select %227, %215, %228 : vector<8x8xi1>, vector<8x8xf32>
    %cst_79 = arith.constant dense<0.000000e+00> : vector<8xf32>
    %230 = vector.multi_reduction <add>, %229, %cst_79 [1] : vector<8x8xf32> to vector<8xf32>
    %231 = vector.shape_cast %230 : vector<8xf32> to vector<8x1xf32>
    %232 = vector.broadcast %225 : vector<8x1xf32> to vector<8x8xf32>
    %233 = vector.broadcast %217 : vector<1x8xf32> to vector<8x8xf32>
    %234 = arith.subf %232, %233 : vector<8x8xf32>
    %235 = math.tanh %234 : vector<8x8xf32>
    %cst_80 = arith.constant 5.000000e-01 : f32
    %236 = vector.broadcast %cst_80 : f32 to vector<8x8xf32>
    %237 = arith.mulf %236, %235 : vector<8x8xf32>
    %cst_81 = arith.constant 5.000000e-01 : f32
    %238 = vector.broadcast %cst_81 : f32 to vector<8x8xf32>
    %239 = arith.addf %238, %237 : vector<8x8xf32>
    %cst_82 = arith.constant 0.000000e+00 : f32
    %240 = vector.shape_cast %213 : vector<8x1xi1> to vector<8x1xi1>
    %241 = vector.broadcast %240 : vector<8x1xi1> to vector<8x8xi1>
    %242 = vector.broadcast %cst_82 : f32 to vector<8x8xf32>
    %243 = arith.select %241, %239, %242 : vector<8x8xi1>, vector<8x8xf32>
    %cst_83 = arith.constant dense<0.000000e+00> : vector<8xf32>
    %244 = vector.multi_reduction <add>, %243, %cst_83 [0] : vector<8x8xf32> to vector<8xf32>
    %245 = vector.shape_cast %244 : vector<8xf32> to vector<1x8xf32>
    %cst_84 = arith.constant 5.000000e-01 : f32
    %246 = vector.broadcast %cst_84 : f32 to vector<1x8xf32>
    %247 = arith.addf %245, %246 : vector<1x8xf32>
    %cst_85 = arith.constant 1.000000e+00 : f32
    %248 = vector.broadcast %cst_85 : f32 to vector<1x8xf32>
    %249 = arith.addf %247, %248 : vector<1x8xf32>
    %250 = math.log %249 : vector<1x8xf32>
    %cst_86 = arith.constant 1.44269502 : f32
    %251 = vector.broadcast %cst_86 : f32 to vector<1x8xf32>
    %252 = arith.mulf %250, %251 : vector<1x8xf32>
    %253 = tpu.reciprocal %252 {approx = true} : vector<1x8xf32> -> vector<1x8xf32>
    %254 = arith.mulf %252, %253 : vector<1x8xf32>
    %cst_87 = arith.constant 2.000000e+00 : f32
    %255 = vector.broadcast %cst_87 : f32 to vector<1x8xf32>
    %256 = arith.subf %255, %254 : vector<1x8xf32>
    %257 = arith.mulf %253, %256 : vector<1x8xf32>
    %258 = arith.mulf %219, %257 : vector<1x8xf32>
    %cst_88 = arith.constant 0.000000e+00 : f32
    %259 = vector.broadcast %cst_88 : f32 to vector<1x8xf32>
    %260 = arith.select %211, %258, %259 : vector<1x8xi1>, vector<1x8xf32>
    %cst_89 = arith.constant dense<0.000000e+00> : vector<1xf32>
    %261 = vector.multi_reduction <add>, %260, %cst_89 [1] : vector<1x8xf32> to vector<1xf32>
    %262 = vector.shape_cast %261 : vector<1xf32> to vector<1x1xf32>
    %263 = vector.broadcast %231 : vector<8x1xf32> to vector<8x8xf32>
    %264 = vector.broadcast %219 : vector<1x8xf32> to vector<8x8xf32>
    %265 = arith.cmpf ogt, %263, %264 : vector<8x8xf32>
    %266 = vector.broadcast %231 : vector<8x1xf32> to vector<8x8xf32>
    %267 = vector.broadcast %219 : vector<1x8xf32> to vector<8x8xf32>
    %268 = arith.cmpf oeq, %266, %267 : vector<8x8xf32>
    %269 = arith.andi %268, %30 : vector<8x8xi1>
    %270 = arith.ori %265, %269 : vector<8x8xi1>
    %271 = vector.broadcast %213 : vector<8x1xi1> to vector<8x8xi1>
    %272 = arith.andi %270, %271 : vector<8x8xi1>
    %273 = arith.extui %272 : vector<8x8xi1> to vector<8x8xi32>
    %274 = arith.sitofp %273 : vector<8x8xi32> to vector<8x8xf32>
    %cst_90 = arith.constant dense<0.000000e+00> : vector<8xf32>
    %275 = vector.multi_reduction <add>, %274, %cst_90 [0] : vector<8x8xf32> to vector<8xf32>
    %276 = vector.shape_cast %275 : vector<8xf32> to vector<1x8xf32>
    %cst_91 = arith.constant 2.000000e+00 : f32
    %277 = vector.broadcast %cst_91 : f32 to vector<1x8xf32>
    %278 = arith.addf %276, %277 : vector<1x8xf32>
    %279 = math.log %278 : vector<1x8xf32>
    %cst_92 = arith.constant 1.44269502 : f32
    %280 = vector.broadcast %cst_92 : f32 to vector<1x8xf32>
    %281 = arith.mulf %279, %280 : vector<1x8xf32>
    %282 = tpu.reciprocal %281 {approx = true} : vector<1x8xf32> -> vector<1x8xf32>
    %283 = arith.mulf %281, %282 : vector<1x8xf32>
    %cst_93 = arith.constant 2.000000e+00 : f32
    %284 = vector.broadcast %cst_93 : f32 to vector<1x8xf32>
    %285 = arith.subf %284, %283 : vector<1x8xf32>
    %286 = arith.mulf %282, %285 : vector<1x8xf32>
    %287 = arith.mulf %219, %286 : vector<1x8xf32>
    %cst_94 = arith.constant 0.000000e+00 : f32
    %288 = vector.broadcast %cst_94 : f32 to vector<1x8xf32>
    %289 = arith.select %211, %287, %288 : vector<1x8xi1>, vector<1x8xf32>
    %cst_95 = arith.constant dense<0.000000e+00> : vector<1xf32>
    %290 = vector.multi_reduction <add>, %289, %cst_95 [1] : vector<1x8xf32> to vector<1xf32>
    %291 = vector.shape_cast %290 : vector<1xf32> to vector<1x1xf32>
    %cst_96 = arith.constant 1.000000e-30 : f32
    %292 = vector.broadcast %cst_96 : f32 to vector<1x1xf32>
    %293 = arith.maximumf %291, %292 : vector<1x1xf32>
    %294 = arith.divf %262, %293 : vector<1x1xf32>
    %295 = arith.addf %207, %294 : vector<1x1xf32>
    %c3_i32 = arith.constant 3 : i32
    %296 = vector.broadcast %c3_i32 : i32 to vector<1x8xi32>
    %297 = arith.cmpi eq, %26, %296 : vector<1x8xi32>
    %298 = vector.broadcast %c3_i32 : i32 to vector<1x8xi32>
    %299 = arith.cmpi ne, %26, %298 : vector<1x8xi32>
    %300 = vector.broadcast %c3_i32 : i32 to vector<8x1xi32>
    %301 = arith.cmpi ne, %27, %300 : vector<8x1xi32>
    %c0_97 = arith.constant 0 : index
    %c0_98 = arith.constant 0 : index
    %302 = vector.load %arg5[%c0_97, %c0_98] : memref<8x8xf32, #tpu.memory_space<vmem>>, vector<8x8xf32>
    %c0_99 = arith.constant 0 : index
    %c0_100 = arith.constant 0 : index
    %303 = vector.load %arg6[%c0_99, %c0_100] : memref<8x8xf32, #tpu.memory_space<vmem>>, vector<8x8xf32>
    %304 = arith.index_cast %c3_i32 : i32 to index
    %c0_101 = arith.constant 0 : index
    %305 = vector.load %arg5[%304, %c0_101] : memref<8x8xf32, #tpu.memory_space<vmem>>, vector<1x8xf32>
    %306 = arith.index_cast %c3_i32 : i32 to index
    %c0_102 = arith.constant 0 : index
    %307 = vector.load %arg6[%306, %c0_102] : memref<8x8xf32, #tpu.memory_space<vmem>>, vector<1x8xf32>
    %cst_103 = arith.constant 0.000000e+00 : f32
    %308 = vector.shape_cast %297 : vector<1x8xi1> to vector<1x8xi1>
    %309 = vector.broadcast %308 : vector<1x8xi1> to vector<8x8xi1>
    %310 = vector.broadcast %cst_103 : f32 to vector<8x8xf32>
    %311 = arith.select %309, %302, %310 : vector<8x8xi1>, vector<8x8xf32>
    %cst_104 = arith.constant dense<0.000000e+00> : vector<8xf32>
    %312 = vector.multi_reduction <add>, %311, %cst_104 [1] : vector<8x8xf32> to vector<8xf32>
    %313 = vector.shape_cast %312 : vector<8xf32> to vector<8x1xf32>
    %cst_105 = arith.constant 0.000000e+00 : f32
    %314 = vector.shape_cast %297 : vector<1x8xi1> to vector<1x8xi1>
    %315 = vector.broadcast %314 : vector<1x8xi1> to vector<8x8xi1>
    %316 = vector.broadcast %cst_105 : f32 to vector<8x8xf32>
    %317 = arith.select %315, %303, %316 : vector<8x8xi1>, vector<8x8xf32>
    %cst_106 = arith.constant dense<0.000000e+00> : vector<8xf32>
    %318 = vector.multi_reduction <add>, %317, %cst_106 [1] : vector<8x8xf32> to vector<8xf32>
    %319 = vector.shape_cast %318 : vector<8xf32> to vector<8x1xf32>
    %320 = vector.broadcast %313 : vector<8x1xf32> to vector<8x8xf32>
    %321 = vector.broadcast %305 : vector<1x8xf32> to vector<8x8xf32>
    %322 = arith.subf %320, %321 : vector<8x8xf32>
    %323 = math.tanh %322 : vector<8x8xf32>
    %cst_107 = arith.constant 5.000000e-01 : f32
    %324 = vector.broadcast %cst_107 : f32 to vector<8x8xf32>
    %325 = arith.mulf %324, %323 : vector<8x8xf32>
    %cst_108 = arith.constant 5.000000e-01 : f32
    %326 = vector.broadcast %cst_108 : f32 to vector<8x8xf32>
    %327 = arith.addf %326, %325 : vector<8x8xf32>
    %cst_109 = arith.constant 0.000000e+00 : f32
    %328 = vector.shape_cast %301 : vector<8x1xi1> to vector<8x1xi1>
    %329 = vector.broadcast %328 : vector<8x1xi1> to vector<8x8xi1>
    %330 = vector.broadcast %cst_109 : f32 to vector<8x8xf32>
    %331 = arith.select %329, %327, %330 : vector<8x8xi1>, vector<8x8xf32>
    %cst_110 = arith.constant dense<0.000000e+00> : vector<8xf32>
    %332 = vector.multi_reduction <add>, %331, %cst_110 [0] : vector<8x8xf32> to vector<8xf32>
    %333 = vector.shape_cast %332 : vector<8xf32> to vector<1x8xf32>
    %cst_111 = arith.constant 5.000000e-01 : f32
    %334 = vector.broadcast %cst_111 : f32 to vector<1x8xf32>
    %335 = arith.addf %333, %334 : vector<1x8xf32>
    %cst_112 = arith.constant 1.000000e+00 : f32
    %336 = vector.broadcast %cst_112 : f32 to vector<1x8xf32>
    %337 = arith.addf %335, %336 : vector<1x8xf32>
    %338 = math.log %337 : vector<1x8xf32>
    %cst_113 = arith.constant 1.44269502 : f32
    %339 = vector.broadcast %cst_113 : f32 to vector<1x8xf32>
    %340 = arith.mulf %338, %339 : vector<1x8xf32>
    %341 = tpu.reciprocal %340 {approx = true} : vector<1x8xf32> -> vector<1x8xf32>
    %342 = arith.mulf %340, %341 : vector<1x8xf32>
    %cst_114 = arith.constant 2.000000e+00 : f32
    %343 = vector.broadcast %cst_114 : f32 to vector<1x8xf32>
    %344 = arith.subf %343, %342 : vector<1x8xf32>
    %345 = arith.mulf %341, %344 : vector<1x8xf32>
    %346 = arith.mulf %307, %345 : vector<1x8xf32>
    %cst_115 = arith.constant 0.000000e+00 : f32
    %347 = vector.broadcast %cst_115 : f32 to vector<1x8xf32>
    %348 = arith.select %299, %346, %347 : vector<1x8xi1>, vector<1x8xf32>
    %cst_116 = arith.constant dense<0.000000e+00> : vector<1xf32>
    %349 = vector.multi_reduction <add>, %348, %cst_116 [1] : vector<1x8xf32> to vector<1xf32>
    %350 = vector.shape_cast %349 : vector<1xf32> to vector<1x1xf32>
    %351 = vector.broadcast %319 : vector<8x1xf32> to vector<8x8xf32>
    %352 = vector.broadcast %307 : vector<1x8xf32> to vector<8x8xf32>
    %353 = arith.cmpf ogt, %351, %352 : vector<8x8xf32>
    %354 = vector.broadcast %319 : vector<8x1xf32> to vector<8x8xf32>
    %355 = vector.broadcast %307 : vector<1x8xf32> to vector<8x8xf32>
    %356 = arith.cmpf oeq, %354, %355 : vector<8x8xf32>
    %357 = arith.andi %356, %30 : vector<8x8xi1>
    %358 = arith.ori %353, %357 : vector<8x8xi1>
    %359 = vector.broadcast %301 : vector<8x1xi1> to vector<8x8xi1>
    %360 = arith.andi %358, %359 : vector<8x8xi1>
    %361 = arith.extui %360 : vector<8x8xi1> to vector<8x8xi32>
    %362 = arith.sitofp %361 : vector<8x8xi32> to vector<8x8xf32>
    %cst_117 = arith.constant dense<0.000000e+00> : vector<8xf32>
    %363 = vector.multi_reduction <add>, %362, %cst_117 [0] : vector<8x8xf32> to vector<8xf32>
    %364 = vector.shape_cast %363 : vector<8xf32> to vector<1x8xf32>
    %cst_118 = arith.constant 2.000000e+00 : f32
    %365 = vector.broadcast %cst_118 : f32 to vector<1x8xf32>
    %366 = arith.addf %364, %365 : vector<1x8xf32>
    %367 = math.log %366 : vector<1x8xf32>
    %cst_119 = arith.constant 1.44269502 : f32
    %368 = vector.broadcast %cst_119 : f32 to vector<1x8xf32>
    %369 = arith.mulf %367, %368 : vector<1x8xf32>
    %370 = tpu.reciprocal %369 {approx = true} : vector<1x8xf32> -> vector<1x8xf32>
    %371 = arith.mulf %369, %370 : vector<1x8xf32>
    %cst_120 = arith.constant 2.000000e+00 : f32
    %372 = vector.broadcast %cst_120 : f32 to vector<1x8xf32>
    %373 = arith.subf %372, %371 : vector<1x8xf32>
    %374 = arith.mulf %370, %373 : vector<1x8xf32>
    %375 = arith.mulf %307, %374 : vector<1x8xf32>
    %cst_121 = arith.constant 0.000000e+00 : f32
    %376 = vector.broadcast %cst_121 : f32 to vector<1x8xf32>
    %377 = arith.select %299, %375, %376 : vector<1x8xi1>, vector<1x8xf32>
    %cst_122 = arith.constant dense<0.000000e+00> : vector<1xf32>
    %378 = vector.multi_reduction <add>, %377, %cst_122 [1] : vector<1x8xf32> to vector<1xf32>
    %379 = vector.shape_cast %378 : vector<1xf32> to vector<1x1xf32>
    %cst_123 = arith.constant 1.000000e-30 : f32
    %380 = vector.broadcast %cst_123 : f32 to vector<1x1xf32>
    %381 = arith.maximumf %379, %380 : vector<1x1xf32>
    %382 = arith.divf %350, %381 : vector<1x1xf32>
    %383 = arith.addf %295, %382 : vector<1x1xf32>
    %c4_i32 = arith.constant 4 : i32
    %384 = vector.broadcast %c4_i32 : i32 to vector<1x8xi32>
    %385 = arith.cmpi eq, %26, %384 : vector<1x8xi32>
    %386 = vector.broadcast %c4_i32 : i32 to vector<1x8xi32>
    %387 = arith.cmpi ne, %26, %386 : vector<1x8xi32>
    %388 = vector.broadcast %c4_i32 : i32 to vector<8x1xi32>
    %389 = arith.cmpi ne, %27, %388 : vector<8x1xi32>
    %c0_124 = arith.constant 0 : index
    %c0_125 = arith.constant 0 : index
    %390 = vector.load %arg5[%c0_124, %c0_125] : memref<8x8xf32, #tpu.memory_space<vmem>>, vector<8x8xf32>
    %c0_126 = arith.constant 0 : index
    %c0_127 = arith.constant 0 : index
    %391 = vector.load %arg6[%c0_126, %c0_127] : memref<8x8xf32, #tpu.memory_space<vmem>>, vector<8x8xf32>
    %392 = arith.index_cast %c4_i32 : i32 to index
    %c0_128 = arith.constant 0 : index
    %393 = vector.load %arg5[%392, %c0_128] : memref<8x8xf32, #tpu.memory_space<vmem>>, vector<1x8xf32>
    %394 = arith.index_cast %c4_i32 : i32 to index
    %c0_129 = arith.constant 0 : index
    %395 = vector.load %arg6[%394, %c0_129] : memref<8x8xf32, #tpu.memory_space<vmem>>, vector<1x8xf32>
    %cst_130 = arith.constant 0.000000e+00 : f32
    %396 = vector.shape_cast %385 : vector<1x8xi1> to vector<1x8xi1>
    %397 = vector.broadcast %396 : vector<1x8xi1> to vector<8x8xi1>
    %398 = vector.broadcast %cst_130 : f32 to vector<8x8xf32>
    %399 = arith.select %397, %390, %398 : vector<8x8xi1>, vector<8x8xf32>
    %cst_131 = arith.constant dense<0.000000e+00> : vector<8xf32>
    %400 = vector.multi_reduction <add>, %399, %cst_131 [1] : vector<8x8xf32> to vector<8xf32>
    %401 = vector.shape_cast %400 : vector<8xf32> to vector<8x1xf32>
    %cst_132 = arith.constant 0.000000e+00 : f32
    %402 = vector.shape_cast %385 : vector<1x8xi1> to vector<1x8xi1>
    %403 = vector.broadcast %402 : vector<1x8xi1> to vector<8x8xi1>
    %404 = vector.broadcast %cst_132 : f32 to vector<8x8xf32>
    %405 = arith.select %403, %391, %404 : vector<8x8xi1>, vector<8x8xf32>
    %cst_133 = arith.constant dense<0.000000e+00> : vector<8xf32>
    %406 = vector.multi_reduction <add>, %405, %cst_133 [1] : vector<8x8xf32> to vector<8xf32>
    %407 = vector.shape_cast %406 : vector<8xf32> to vector<8x1xf32>
    %408 = vector.broadcast %401 : vector<8x1xf32> to vector<8x8xf32>
    %409 = vector.broadcast %393 : vector<1x8xf32> to vector<8x8xf32>
    %410 = arith.subf %408, %409 : vector<8x8xf32>
    %411 = math.tanh %410 : vector<8x8xf32>
    %cst_134 = arith.constant 5.000000e-01 : f32
    %412 = vector.broadcast %cst_134 : f32 to vector<8x8xf32>
    %413 = arith.mulf %412, %411 : vector<8x8xf32>
    %cst_135 = arith.constant 5.000000e-01 : f32
    %414 = vector.broadcast %cst_135 : f32 to vector<8x8xf32>
    %415 = arith.addf %414, %413 : vector<8x8xf32>
    %cst_136 = arith.constant 0.000000e+00 : f32
    %416 = vector.shape_cast %389 : vector<8x1xi1> to vector<8x1xi1>
    %417 = vector.broadcast %416 : vector<8x1xi1> to vector<8x8xi1>
    %418 = vector.broadcast %cst_136 : f32 to vector<8x8xf32>
    %419 = arith.select %417, %415, %418 : vector<8x8xi1>, vector<8x8xf32>
    %cst_137 = arith.constant dense<0.000000e+00> : vector<8xf32>
    %420 = vector.multi_reduction <add>, %419, %cst_137 [0] : vector<8x8xf32> to vector<8xf32>
    %421 = vector.shape_cast %420 : vector<8xf32> to vector<1x8xf32>
    %cst_138 = arith.constant 5.000000e-01 : f32
    %422 = vector.broadcast %cst_138 : f32 to vector<1x8xf32>
    %423 = arith.addf %421, %422 : vector<1x8xf32>
    %cst_139 = arith.constant 1.000000e+00 : f32
    %424 = vector.broadcast %cst_139 : f32 to vector<1x8xf32>
    %425 = arith.addf %423, %424 : vector<1x8xf32>
    %426 = math.log %425 : vector<1x8xf32>
    %cst_140 = arith.constant 1.44269502 : f32
    %427 = vector.broadcast %cst_140 : f32 to vector<1x8xf32>
    %428 = arith.mulf %426, %427 : vector<1x8xf32>
    %429 = tpu.reciprocal %428 {approx = true} : vector<1x8xf32> -> vector<1x8xf32>
    %430 = arith.mulf %428, %429 : vector<1x8xf32>
    %cst_141 = arith.constant 2.000000e+00 : f32
    %431 = vector.broadcast %cst_141 : f32 to vector<1x8xf32>
    %432 = arith.subf %431, %430 : vector<1x8xf32>
    %433 = arith.mulf %429, %432 : vector<1x8xf32>
    %434 = arith.mulf %395, %433 : vector<1x8xf32>
    %cst_142 = arith.constant 0.000000e+00 : f32
    %435 = vector.broadcast %cst_142 : f32 to vector<1x8xf32>
    %436 = arith.select %387, %434, %435 : vector<1x8xi1>, vector<1x8xf32>
    %cst_143 = arith.constant dense<0.000000e+00> : vector<1xf32>
    %437 = vector.multi_reduction <add>, %436, %cst_143 [1] : vector<1x8xf32> to vector<1xf32>
    %438 = vector.shape_cast %437 : vector<1xf32> to vector<1x1xf32>
    %439 = vector.broadcast %407 : vector<8x1xf32> to vector<8x8xf32>
    %440 = vector.broadcast %395 : vector<1x8xf32> to vector<8x8xf32>
    %441 = arith.cmpf ogt, %439, %440 : vector<8x8xf32>
    %442 = vector.broadcast %407 : vector<8x1xf32> to vector<8x8xf32>
    %443 = vector.broadcast %395 : vector<1x8xf32> to vector<8x8xf32>
    %444 = arith.cmpf oeq, %442, %443 : vector<8x8xf32>
    %445 = arith.andi %444, %30 : vector<8x8xi1>
    %446 = arith.ori %441, %445 : vector<8x8xi1>
    %447 = vector.broadcast %389 : vector<8x1xi1> to vector<8x8xi1>
    %448 = arith.andi %446, %447 : vector<8x8xi1>
    %449 = arith.extui %448 : vector<8x8xi1> to vector<8x8xi32>
    %450 = arith.sitofp %449 : vector<8x8xi32> to vector<8x8xf32>
    %cst_144 = arith.constant dense<0.000000e+00> : vector<8xf32>
    %451 = vector.multi_reduction <add>, %450, %cst_144 [0] : vector<8x8xf32> to vector<8xf32>
    %452 = vector.shape_cast %451 : vector<8xf32> to vector<1x8xf32>
    %cst_145 = arith.constant 2.000000e+00 : f32
    %453 = vector.broadcast %cst_145 : f32 to vector<1x8xf32>
    %454 = arith.addf %452, %453 : vector<1x8xf32>
    %455 = math.log %454 : vector<1x8xf32>
    %cst_146 = arith.constant 1.44269502 : f32
    %456 = vector.broadcast %cst_146 : f32 to vector<1x8xf32>
    %457 = arith.mulf %455, %456 : vector<1x8xf32>
    %458 = tpu.reciprocal %457 {approx = true} : vector<1x8xf32> -> vector<1x8xf32>
    %459 = arith.mulf %457, %458 : vector<1x8xf32>
    %cst_147 = arith.constant 2.000000e+00 : f32
    %460 = vector.broadcast %cst_147 : f32 to vector<1x8xf32>
    %461 = arith.subf %460, %459 : vector<1x8xf32>
    %462 = arith.mulf %458, %461 : vector<1x8xf32>
    %463 = arith.mulf %395, %462 : vector<1x8xf32>
    %cst_148 = arith.constant 0.000000e+00 : f32
    %464 = vector.broadcast %cst_148 : f32 to vector<1x8xf32>
    %465 = arith.select %387, %463, %464 : vector<1x8xi1>, vector<1x8xf32>
    %cst_149 = arith.constant dense<0.000000e+00> : vector<1xf32>
    %466 = vector.multi_reduction <add>, %465, %cst_149 [1] : vector<1x8xf32> to vector<1xf32>
    %467 = vector.shape_cast %466 : vector<1xf32> to vector<1x1xf32>
    %cst_150 = arith.constant 1.000000e-30 : f32
    %468 = vector.broadcast %cst_150 : f32 to vector<1x1xf32>
    %469 = arith.maximumf %467, %468 : vector<1x1xf32>
    %470 = arith.divf %438, %469 : vector<1x1xf32>
    %471 = arith.addf %383, %470 : vector<1x1xf32>
    %c5_i32 = arith.constant 5 : i32
    %472 = vector.broadcast %c5_i32 : i32 to vector<1x8xi32>
    %473 = arith.cmpi eq, %26, %472 : vector<1x8xi32>
    %474 = vector.broadcast %c5_i32 : i32 to vector<1x8xi32>
    %475 = arith.cmpi ne, %26, %474 : vector<1x8xi32>
    %476 = vector.broadcast %c5_i32 : i32 to vector<8x1xi32>
    %477 = arith.cmpi ne, %27, %476 : vector<8x1xi32>
    %c0_151 = arith.constant 0 : index
    %c0_152 = arith.constant 0 : index
    %478 = vector.load %arg5[%c0_151, %c0_152] : memref<8x8xf32, #tpu.memory_space<vmem>>, vector<8x8xf32>
    %c0_153 = arith.constant 0 : index
    %c0_154 = arith.constant 0 : index
    %479 = vector.load %arg6[%c0_153, %c0_154] : memref<8x8xf32, #tpu.memory_space<vmem>>, vector<8x8xf32>
    %480 = arith.index_cast %c5_i32 : i32 to index
    %c0_155 = arith.constant 0 : index
    %481 = vector.load %arg5[%480, %c0_155] : memref<8x8xf32, #tpu.memory_space<vmem>>, vector<1x8xf32>
    %482 = arith.index_cast %c5_i32 : i32 to index
    %c0_156 = arith.constant 0 : index
    %483 = vector.load %arg6[%482, %c0_156] : memref<8x8xf32, #tpu.memory_space<vmem>>, vector<1x8xf32>
    %cst_157 = arith.constant 0.000000e+00 : f32
    %484 = vector.shape_cast %473 : vector<1x8xi1> to vector<1x8xi1>
    %485 = vector.broadcast %484 : vector<1x8xi1> to vector<8x8xi1>
    %486 = vector.broadcast %cst_157 : f32 to vector<8x8xf32>
    %487 = arith.select %485, %478, %486 : vector<8x8xi1>, vector<8x8xf32>
    %cst_158 = arith.constant dense<0.000000e+00> : vector<8xf32>
    %488 = vector.multi_reduction <add>, %487, %cst_158 [1] : vector<8x8xf32> to vector<8xf32>
    %489 = vector.shape_cast %488 : vector<8xf32> to vector<8x1xf32>
    %cst_159 = arith.constant 0.000000e+00 : f32
    %490 = vector.shape_cast %473 : vector<1x8xi1> to vector<1x8xi1>
    %491 = vector.broadcast %490 : vector<1x8xi1> to vector<8x8xi1>
    %492 = vector.broadcast %cst_159 : f32 to vector<8x8xf32>
    %493 = arith.select %491, %479, %492 : vector<8x8xi1>, vector<8x8xf32>
    %cst_160 = arith.constant dense<0.000000e+00> : vector<8xf32>
    %494 = vector.multi_reduction <add>, %493, %cst_160 [1] : vector<8x8xf32> to vector<8xf32>
    %495 = vector.shape_cast %494 : vector<8xf32> to vector<8x1xf32>
    %496 = vector.broadcast %489 : vector<8x1xf32> to vector<8x8xf32>
    %497 = vector.broadcast %481 : vector<1x8xf32> to vector<8x8xf32>
    %498 = arith.subf %496, %497 : vector<8x8xf32>
    %499 = math.tanh %498 : vector<8x8xf32>
    %cst_161 = arith.constant 5.000000e-01 : f32
    %500 = vector.broadcast %cst_161 : f32 to vector<8x8xf32>
    %501 = arith.mulf %500, %499 : vector<8x8xf32>
    %cst_162 = arith.constant 5.000000e-01 : f32
    %502 = vector.broadcast %cst_162 : f32 to vector<8x8xf32>
    %503 = arith.addf %502, %501 : vector<8x8xf32>
    %cst_163 = arith.constant 0.000000e+00 : f32
    %504 = vector.shape_cast %477 : vector<8x1xi1> to vector<8x1xi1>
    %505 = vector.broadcast %504 : vector<8x1xi1> to vector<8x8xi1>
    %506 = vector.broadcast %cst_163 : f32 to vector<8x8xf32>
    %507 = arith.select %505, %503, %506 : vector<8x8xi1>, vector<8x8xf32>
    %cst_164 = arith.constant dense<0.000000e+00> : vector<8xf32>
    %508 = vector.multi_reduction <add>, %507, %cst_164 [0] : vector<8x8xf32> to vector<8xf32>
    %509 = vector.shape_cast %508 : vector<8xf32> to vector<1x8xf32>
    %cst_165 = arith.constant 5.000000e-01 : f32
    %510 = vector.broadcast %cst_165 : f32 to vector<1x8xf32>
    %511 = arith.addf %509, %510 : vector<1x8xf32>
    %cst_166 = arith.constant 1.000000e+00 : f32
    %512 = vector.broadcast %cst_166 : f32 to vector<1x8xf32>
    %513 = arith.addf %511, %512 : vector<1x8xf32>
    %514 = math.log %513 : vector<1x8xf32>
    %cst_167 = arith.constant 1.44269502 : f32
    %515 = vector.broadcast %cst_167 : f32 to vector<1x8xf32>
    %516 = arith.mulf %514, %515 : vector<1x8xf32>
    %517 = tpu.reciprocal %516 {approx = true} : vector<1x8xf32> -> vector<1x8xf32>
    %518 = arith.mulf %516, %517 : vector<1x8xf32>
    %cst_168 = arith.constant 2.000000e+00 : f32
    %519 = vector.broadcast %cst_168 : f32 to vector<1x8xf32>
    %520 = arith.subf %519, %518 : vector<1x8xf32>
    %521 = arith.mulf %517, %520 : vector<1x8xf32>
    %522 = arith.mulf %483, %521 : vector<1x8xf32>
    %cst_169 = arith.constant 0.000000e+00 : f32
    %523 = vector.broadcast %cst_169 : f32 to vector<1x8xf32>
    %524 = arith.select %475, %522, %523 : vector<1x8xi1>, vector<1x8xf32>
    %cst_170 = arith.constant dense<0.000000e+00> : vector<1xf32>
    %525 = vector.multi_reduction <add>, %524, %cst_170 [1] : vector<1x8xf32> to vector<1xf32>
    %526 = vector.shape_cast %525 : vector<1xf32> to vector<1x1xf32>
    %527 = vector.broadcast %495 : vector<8x1xf32> to vector<8x8xf32>
    %528 = vector.broadcast %483 : vector<1x8xf32> to vector<8x8xf32>
    %529 = arith.cmpf ogt, %527, %528 : vector<8x8xf32>
    %530 = vector.broadcast %495 : vector<8x1xf32> to vector<8x8xf32>
    %531 = vector.broadcast %483 : vector<1x8xf32> to vector<8x8xf32>
    %532 = arith.cmpf oeq, %530, %531 : vector<8x8xf32>
    %533 = arith.andi %532, %30 : vector<8x8xi1>
    %534 = arith.ori %529, %533 : vector<8x8xi1>
    %535 = vector.broadcast %477 : vector<8x1xi1> to vector<8x8xi1>
    %536 = arith.andi %534, %535 : vector<8x8xi1>
    %537 = arith.extui %536 : vector<8x8xi1> to vector<8x8xi32>
    %538 = arith.sitofp %537 : vector<8x8xi32> to vector<8x8xf32>
    %cst_171 = arith.constant dense<0.000000e+00> : vector<8xf32>
    %539 = vector.multi_reduction <add>, %538, %cst_171 [0] : vector<8x8xf32> to vector<8xf32>
    %540 = vector.shape_cast %539 : vector<8xf32> to vector<1x8xf32>
    %cst_172 = arith.constant 2.000000e+00 : f32
    %541 = vector.broadcast %cst_172 : f32 to vector<1x8xf32>
    %542 = arith.addf %540, %541 : vector<1x8xf32>
    %543 = math.log %542 : vector<1x8xf32>
    %cst_173 = arith.constant 1.44269502 : f32
    %544 = vector.broadcast %cst_173 : f32 to vector<1x8xf32>
    %545 = arith.mulf %543, %544 : vector<1x8xf32>
    %546 = tpu.reciprocal %545 {approx = true} : vector<1x8xf32> -> vector<1x8xf32>
    %547 = arith.mulf %545, %546 : vector<1x8xf32>
    %cst_174 = arith.constant 2.000000e+00 : f32
    %548 = vector.broadcast %cst_174 : f32 to vector<1x8xf32>
    %549 = arith.subf %548, %547 : vector<1x8xf32>
    %550 = arith.mulf %546, %549 : vector<1x8xf32>
    %551 = arith.mulf %483, %550 : vector<1x8xf32>
    %cst_175 = arith.constant 0.000000e+00 : f32
    %552 = vector.broadcast %cst_175 : f32 to vector<1x8xf32>
    %553 = arith.select %475, %551, %552 : vector<1x8xi1>, vector<1x8xf32>
    %cst_176 = arith.constant dense<0.000000e+00> : vector<1xf32>
    %554 = vector.multi_reduction <add>, %553, %cst_176 [1] : vector<1x8xf32> to vector<1xf32>
    %555 = vector.shape_cast %554 : vector<1xf32> to vector<1x1xf32>
    %cst_177 = arith.constant 1.000000e-30 : f32
    %556 = vector.broadcast %cst_177 : f32 to vector<1x1xf32>
    %557 = arith.maximumf %555, %556 : vector<1x1xf32>
    %558 = arith.divf %526, %557 : vector<1x1xf32>
    %559 = arith.addf %471, %558 : vector<1x1xf32>
    %c6_i32 = arith.constant 6 : i32
    %560 = vector.broadcast %c6_i32 : i32 to vector<1x8xi32>
    %561 = arith.cmpi eq, %26, %560 : vector<1x8xi32>
    %562 = vector.broadcast %c6_i32 : i32 to vector<1x8xi32>
    %563 = arith.cmpi ne, %26, %562 : vector<1x8xi32>
    %564 = vector.broadcast %c6_i32 : i32 to vector<8x1xi32>
    %565 = arith.cmpi ne, %27, %564 : vector<8x1xi32>
    %c0_178 = arith.constant 0 : index
    %c0_179 = arith.constant 0 : index
    %566 = vector.load %arg5[%c0_178, %c0_179] : memref<8x8xf32, #tpu.memory_space<vmem>>, vector<8x8xf32>
    %c0_180 = arith.constant 0 : index
    %c0_181 = arith.constant 0 : index
    %567 = vector.load %arg6[%c0_180, %c0_181] : memref<8x8xf32, #tpu.memory_space<vmem>>, vector<8x8xf32>
    %568 = arith.index_cast %c6_i32 : i32 to index
    %c0_182 = arith.constant 0 : index
    %569 = vector.load %arg5[%568, %c0_182] : memref<8x8xf32, #tpu.memory_space<vmem>>, vector<1x8xf32>
    %570 = arith.index_cast %c6_i32 : i32 to index
    %c0_183 = arith.constant 0 : index
    %571 = vector.load %arg6[%570, %c0_183] : memref<8x8xf32, #tpu.memory_space<vmem>>, vector<1x8xf32>
    %cst_184 = arith.constant 0.000000e+00 : f32
    %572 = vector.shape_cast %561 : vector<1x8xi1> to vector<1x8xi1>
    %573 = vector.broadcast %572 : vector<1x8xi1> to vector<8x8xi1>
    %574 = vector.broadcast %cst_184 : f32 to vector<8x8xf32>
    %575 = arith.select %573, %566, %574 : vector<8x8xi1>, vector<8x8xf32>
    %cst_185 = arith.constant dense<0.000000e+00> : vector<8xf32>
    %576 = vector.multi_reduction <add>, %575, %cst_185 [1] : vector<8x8xf32> to vector<8xf32>
    %577 = vector.shape_cast %576 : vector<8xf32> to vector<8x1xf32>
    %cst_186 = arith.constant 0.000000e+00 : f32
    %578 = vector.shape_cast %561 : vector<1x8xi1> to vector<1x8xi1>
    %579 = vector.broadcast %578 : vector<1x8xi1> to vector<8x8xi1>
    %580 = vector.broadcast %cst_186 : f32 to vector<8x8xf32>
    %581 = arith.select %579, %567, %580 : vector<8x8xi1>, vector<8x8xf32>
    %cst_187 = arith.constant dense<0.000000e+00> : vector<8xf32>
    %582 = vector.multi_reduction <add>, %581, %cst_187 [1] : vector<8x8xf32> to vector<8xf32>
    %583 = vector.shape_cast %582 : vector<8xf32> to vector<8x1xf32>
    %584 = vector.broadcast %577 : vector<8x1xf32> to vector<8x8xf32>
    %585 = vector.broadcast %569 : vector<1x8xf32> to vector<8x8xf32>
    %586 = arith.subf %584, %585 : vector<8x8xf32>
    %587 = math.tanh %586 : vector<8x8xf32>
    %cst_188 = arith.constant 5.000000e-01 : f32
    %588 = vector.broadcast %cst_188 : f32 to vector<8x8xf32>
    %589 = arith.mulf %588, %587 : vector<8x8xf32>
    %cst_189 = arith.constant 5.000000e-01 : f32
    %590 = vector.broadcast %cst_189 : f32 to vector<8x8xf32>
    %591 = arith.addf %590, %589 : vector<8x8xf32>
    %cst_190 = arith.constant 0.000000e+00 : f32
    %592 = vector.shape_cast %565 : vector<8x1xi1> to vector<8x1xi1>
    %593 = vector.broadcast %592 : vector<8x1xi1> to vector<8x8xi1>
    %594 = vector.broadcast %cst_190 : f32 to vector<8x8xf32>
    %595 = arith.select %593, %591, %594 : vector<8x8xi1>, vector<8x8xf32>
    %cst_191 = arith.constant dense<0.000000e+00> : vector<8xf32>
    %596 = vector.multi_reduction <add>, %595, %cst_191 [0] : vector<8x8xf32> to vector<8xf32>
    %597 = vector.shape_cast %596 : vector<8xf32> to vector<1x8xf32>
    %cst_192 = arith.constant 5.000000e-01 : f32
    %598 = vector.broadcast %cst_192 : f32 to vector<1x8xf32>
    %599 = arith.addf %597, %598 : vector<1x8xf32>
    %cst_193 = arith.constant 1.000000e+00 : f32
    %600 = vector.broadcast %cst_193 : f32 to vector<1x8xf32>
    %601 = arith.addf %599, %600 : vector<1x8xf32>
    %602 = math.log %601 : vector<1x8xf32>
    %cst_194 = arith.constant 1.44269502 : f32
    %603 = vector.broadcast %cst_194 : f32 to vector<1x8xf32>
    %604 = arith.mulf %602, %603 : vector<1x8xf32>
    %605 = tpu.reciprocal %604 {approx = true} : vector<1x8xf32> -> vector<1x8xf32>
    %606 = arith.mulf %604, %605 : vector<1x8xf32>
    %cst_195 = arith.constant 2.000000e+00 : f32
    %607 = vector.broadcast %cst_195 : f32 to vector<1x8xf32>
    %608 = arith.subf %607, %606 : vector<1x8xf32>
    %609 = arith.mulf %605, %608 : vector<1x8xf32>
    %610 = arith.mulf %571, %609 : vector<1x8xf32>
    %cst_196 = arith.constant 0.000000e+00 : f32
    %611 = vector.broadcast %cst_196 : f32 to vector<1x8xf32>
    %612 = arith.select %563, %610, %611 : vector<1x8xi1>, vector<1x8xf32>
    %cst_197 = arith.constant dense<0.000000e+00> : vector<1xf32>
    %613 = vector.multi_reduction <add>, %612, %cst_197 [1] : vector<1x8xf32> to vector<1xf32>
    %614 = vector.shape_cast %613 : vector<1xf32> to vector<1x1xf32>
    %615 = vector.broadcast %583 : vector<8x1xf32> to vector<8x8xf32>
    %616 = vector.broadcast %571 : vector<1x8xf32> to vector<8x8xf32>
    %617 = arith.cmpf ogt, %615, %616 : vector<8x8xf32>
    %618 = vector.broadcast %583 : vector<8x1xf32> to vector<8x8xf32>
    %619 = vector.broadcast %571 : vector<1x8xf32> to vector<8x8xf32>
    %620 = arith.cmpf oeq, %618, %619 : vector<8x8xf32>
    %621 = arith.andi %620, %30 : vector<8x8xi1>
    %622 = arith.ori %617, %621 : vector<8x8xi1>
    %623 = vector.broadcast %565 : vector<8x1xi1> to vector<8x8xi1>
    %624 = arith.andi %622, %623 : vector<8x8xi1>
    %625 = arith.extui %624 : vector<8x8xi1> to vector<8x8xi32>
    %626 = arith.sitofp %625 : vector<8x8xi32> to vector<8x8xf32>
    %cst_198 = arith.constant dense<0.000000e+00> : vector<8xf32>
    %627 = vector.multi_reduction <add>, %626, %cst_198 [0] : vector<8x8xf32> to vector<8xf32>
    %628 = vector.shape_cast %627 : vector<8xf32> to vector<1x8xf32>
    %cst_199 = arith.constant 2.000000e+00 : f32
    %629 = vector.broadcast %cst_199 : f32 to vector<1x8xf32>
    %630 = arith.addf %628, %629 : vector<1x8xf32>
    %631 = math.log %630 : vector<1x8xf32>
    %cst_200 = arith.constant 1.44269502 : f32
    %632 = vector.broadcast %cst_200 : f32 to vector<1x8xf32>
    %633 = arith.mulf %631, %632 : vector<1x8xf32>
    %634 = tpu.reciprocal %633 {approx = true} : vector<1x8xf32> -> vector<1x8xf32>
    %635 = arith.mulf %633, %634 : vector<1x8xf32>
    %cst_201 = arith.constant 2.000000e+00 : f32
    %636 = vector.broadcast %cst_201 : f32 to vector<1x8xf32>
    %637 = arith.subf %636, %635 : vector<1x8xf32>
    %638 = arith.mulf %634, %637 : vector<1x8xf32>
    %639 = arith.mulf %571, %638 : vector<1x8xf32>
    %cst_202 = arith.constant 0.000000e+00 : f32
    %640 = vector.broadcast %cst_202 : f32 to vector<1x8xf32>
    %641 = arith.select %563, %639, %640 : vector<1x8xi1>, vector<1x8xf32>
    %cst_203 = arith.constant dense<0.000000e+00> : vector<1xf32>
    %642 = vector.multi_reduction <add>, %641, %cst_203 [1] : vector<1x8xf32> to vector<1xf32>
    %643 = vector.shape_cast %642 : vector<1xf32> to vector<1x1xf32>
    %cst_204 = arith.constant 1.000000e-30 : f32
    %644 = vector.broadcast %cst_204 : f32 to vector<1x1xf32>
    %645 = arith.maximumf %643, %644 : vector<1x1xf32>
    %646 = arith.divf %614, %645 : vector<1x1xf32>
    %647 = arith.addf %559, %646 : vector<1x1xf32>
    %c7_i32 = arith.constant 7 : i32
    %648 = vector.broadcast %c7_i32 : i32 to vector<1x8xi32>
    %649 = arith.cmpi eq, %26, %648 : vector<1x8xi32>
    %650 = vector.broadcast %c7_i32 : i32 to vector<1x8xi32>
    %651 = arith.cmpi ne, %26, %650 : vector<1x8xi32>
    %652 = vector.broadcast %c7_i32 : i32 to vector<8x1xi32>
    %653 = arith.cmpi ne, %27, %652 : vector<8x1xi32>
    %c0_205 = arith.constant 0 : index
    %c0_206 = arith.constant 0 : index
    %654 = vector.load %arg5[%c0_205, %c0_206] : memref<8x8xf32, #tpu.memory_space<vmem>>, vector<8x8xf32>
    %c0_207 = arith.constant 0 : index
    %c0_208 = arith.constant 0 : index
    %655 = vector.load %arg6[%c0_207, %c0_208] : memref<8x8xf32, #tpu.memory_space<vmem>>, vector<8x8xf32>
    %656 = arith.index_cast %c7_i32 : i32 to index
    %c0_209 = arith.constant 0 : index
    %657 = vector.load %arg5[%656, %c0_209] : memref<8x8xf32, #tpu.memory_space<vmem>>, vector<1x8xf32>
    %658 = arith.index_cast %c7_i32 : i32 to index
    %c0_210 = arith.constant 0 : index
    %659 = vector.load %arg6[%658, %c0_210] : memref<8x8xf32, #tpu.memory_space<vmem>>, vector<1x8xf32>
    %cst_211 = arith.constant 0.000000e+00 : f32
    %660 = vector.shape_cast %649 : vector<1x8xi1> to vector<1x8xi1>
    %661 = vector.broadcast %660 : vector<1x8xi1> to vector<8x8xi1>
    %662 = vector.broadcast %cst_211 : f32 to vector<8x8xf32>
    %663 = arith.select %661, %654, %662 : vector<8x8xi1>, vector<8x8xf32>
    %cst_212 = arith.constant dense<0.000000e+00> : vector<8xf32>
    %664 = vector.multi_reduction <add>, %663, %cst_212 [1] : vector<8x8xf32> to vector<8xf32>
    %665 = vector.shape_cast %664 : vector<8xf32> to vector<8x1xf32>
    %cst_213 = arith.constant 0.000000e+00 : f32
    %666 = vector.shape_cast %649 : vector<1x8xi1> to vector<1x8xi1>
    %667 = vector.broadcast %666 : vector<1x8xi1> to vector<8x8xi1>
    %668 = vector.broadcast %cst_213 : f32 to vector<8x8xf32>
    %669 = arith.select %667, %655, %668 : vector<8x8xi1>, vector<8x8xf32>
    %cst_214 = arith.constant dense<0.000000e+00> : vector<8xf32>
    %670 = vector.multi_reduction <add>, %669, %cst_214 [1] : vector<8x8xf32> to vector<8xf32>
    %671 = vector.shape_cast %670 : vector<8xf32> to vector<8x1xf32>
    %672 = vector.broadcast %665 : vector<8x1xf32> to vector<8x8xf32>
    %673 = vector.broadcast %657 : vector<1x8xf32> to vector<8x8xf32>
    %674 = arith.subf %672, %673 : vector<8x8xf32>
    %675 = math.tanh %674 : vector<8x8xf32>
    %cst_215 = arith.constant 5.000000e-01 : f32
    %676 = vector.broadcast %cst_215 : f32 to vector<8x8xf32>
    %677 = arith.mulf %676, %675 : vector<8x8xf32>
    %cst_216 = arith.constant 5.000000e-01 : f32
    %678 = vector.broadcast %cst_216 : f32 to vector<8x8xf32>
    %679 = arith.addf %678, %677 : vector<8x8xf32>
    %cst_217 = arith.constant 0.000000e+00 : f32
    %680 = vector.shape_cast %653 : vector<8x1xi1> to vector<8x1xi1>
    %681 = vector.broadcast %680 : vector<8x1xi1> to vector<8x8xi1>
    %682 = vector.broadcast %cst_217 : f32 to vector<8x8xf32>
    %683 = arith.select %681, %679, %682 : vector<8x8xi1>, vector<8x8xf32>
    %cst_218 = arith.constant dense<0.000000e+00> : vector<8xf32>
    %684 = vector.multi_reduction <add>, %683, %cst_218 [0] : vector<8x8xf32> to vector<8xf32>
    %685 = vector.shape_cast %684 : vector<8xf32> to vector<1x8xf32>
    %cst_219 = arith.constant 5.000000e-01 : f32
    %686 = vector.broadcast %cst_219 : f32 to vector<1x8xf32>
    %687 = arith.addf %685, %686 : vector<1x8xf32>
    %cst_220 = arith.constant 1.000000e+00 : f32
    %688 = vector.broadcast %cst_220 : f32 to vector<1x8xf32>
    %689 = arith.addf %687, %688 : vector<1x8xf32>
    %690 = math.log %689 : vector<1x8xf32>
    %cst_221 = arith.constant 1.44269502 : f32
    %691 = vector.broadcast %cst_221 : f32 to vector<1x8xf32>
    %692 = arith.mulf %690, %691 : vector<1x8xf32>
    %693 = tpu.reciprocal %692 {approx = true} : vector<1x8xf32> -> vector<1x8xf32>
    %694 = arith.mulf %692, %693 : vector<1x8xf32>
    %cst_222 = arith.constant 2.000000e+00 : f32
    %695 = vector.broadcast %cst_222 : f32 to vector<1x8xf32>
    %696 = arith.subf %695, %694 : vector<1x8xf32>
    %697 = arith.mulf %693, %696 : vector<1x8xf32>
    %698 = arith.mulf %659, %697 : vector<1x8xf32>
    %cst_223 = arith.constant 0.000000e+00 : f32
    %699 = vector.broadcast %cst_223 : f32 to vector<1x8xf32>
    %700 = arith.select %651, %698, %699 : vector<1x8xi1>, vector<1x8xf32>
    %cst_224 = arith.constant dense<0.000000e+00> : vector<1xf32>
    %701 = vector.multi_reduction <add>, %700, %cst_224 [1] : vector<1x8xf32> to vector<1xf32>
    %702 = vector.shape_cast %701 : vector<1xf32> to vector<1x1xf32>
    %703 = vector.broadcast %671 : vector<8x1xf32> to vector<8x8xf32>
    %704 = vector.broadcast %659 : vector<1x8xf32> to vector<8x8xf32>
    %705 = arith.cmpf ogt, %703, %704 : vector<8x8xf32>
    %706 = vector.broadcast %671 : vector<8x1xf32> to vector<8x8xf32>
    %707 = vector.broadcast %659 : vector<1x8xf32> to vector<8x8xf32>
    %708 = arith.cmpf oeq, %706, %707 : vector<8x8xf32>
    %709 = arith.andi %708, %30 : vector<8x8xi1>
    %710 = arith.ori %705, %709 : vector<8x8xi1>
    %711 = vector.broadcast %653 : vector<8x1xi1> to vector<8x8xi1>
    %712 = arith.andi %710, %711 : vector<8x8xi1>
    %713 = arith.extui %712 : vector<8x8xi1> to vector<8x8xi32>
    %714 = arith.sitofp %713 : vector<8x8xi32> to vector<8x8xf32>
    %cst_225 = arith.constant dense<0.000000e+00> : vector<8xf32>
    %715 = vector.multi_reduction <add>, %714, %cst_225 [0] : vector<8x8xf32> to vector<8xf32>
    %716 = vector.shape_cast %715 : vector<8xf32> to vector<1x8xf32>
    %cst_226 = arith.constant 2.000000e+00 : f32
    %717 = vector.broadcast %cst_226 : f32 to vector<1x8xf32>
    %718 = arith.addf %716, %717 : vector<1x8xf32>
    %719 = math.log %718 : vector<1x8xf32>
    %cst_227 = arith.constant 1.44269502 : f32
    %720 = vector.broadcast %cst_227 : f32 to vector<1x8xf32>
    %721 = arith.mulf %719, %720 : vector<1x8xf32>
    %722 = tpu.reciprocal %721 {approx = true} : vector<1x8xf32> -> vector<1x8xf32>
    %723 = arith.mulf %721, %722 : vector<1x8xf32>
    %cst_228 = arith.constant 2.000000e+00 : f32
    %724 = vector.broadcast %cst_228 : f32 to vector<1x8xf32>
    %725 = arith.subf %724, %723 : vector<1x8xf32>
    %726 = arith.mulf %722, %725 : vector<1x8xf32>
    %727 = arith.mulf %659, %726 : vector<1x8xf32>
    %cst_229 = arith.constant 0.000000e+00 : f32
    %728 = vector.broadcast %cst_229 : f32 to vector<1x8xf32>
    %729 = arith.select %651, %727, %728 : vector<1x8xi1>, vector<1x8xf32>
    %cst_230 = arith.constant dense<0.000000e+00> : vector<1xf32>
    %730 = vector.multi_reduction <add>, %729, %cst_230 [1] : vector<1x8xf32> to vector<1xf32>
    %731 = vector.shape_cast %730 : vector<1xf32> to vector<1x1xf32>
    %cst_231 = arith.constant 1.000000e-30 : f32
    %732 = vector.broadcast %cst_231 : f32 to vector<1x1xf32>
    %733 = arith.maximumf %731, %732 : vector<1x1xf32>
    %734 = arith.divf %702, %733 : vector<1x1xf32>
    %735 = arith.addf %647, %734 : vector<1x1xf32>
    %c8_i32 = arith.constant 8 : i32
    %cst_232 = arith.constant 8.000000e+00 : f32
    %736 = vector.broadcast %cst_232 : f32 to vector<1x1xf32>
    %737 = arith.divf %735, %736 : vector<1x1xf32>
    %cst_233 = arith.constant 1.000000e+00 : f32
    %738 = vector.broadcast %cst_233 : f32 to vector<1x1xf32>
    %739 = arith.subf %738, %737 : vector<1x1xf32>
    %c0_234 = arith.constant 0 : index
    %c0_235 = arith.constant 0 : index
    %740 = vector.load %arg4[%c0_234, %c0_235] : memref<1x1xf32, #tpu.memory_space<vmem>>, vector<1x1xf32>
    tpu.vector_store %arg4[%c0_234, %c0_235], %739 {strides = array<i32>} : memref<1x1xf32, #tpu.memory_space<vmem>>, vector<1x1xf32>,
    return
  }
  func.func @transform_0(%arg0: i32) -> (i32, i32) {
    %c0_i32 = arith.constant 0 : i32
    %c0_i32_0 = arith.constant 0 : i32
    %c0_i32_1 = arith.constant 0 : i32
    return %c0_i32, %c0_i32_0 : i32, i32
  }
  func.func @transform_1(%arg0: i32) -> (i32, i32) {
    %c0_i32 = arith.constant 0 : i32
    %c0_i32_0 = arith.constant 0 : i32
    %c0_i32_1 = arith.constant 0 : i32
    return %c0_i32, %c0_i32_0 : i32, i32
  }
  func.func @transform_2(%arg0: i32) -> (i32, i32) {
    %c0_i32 = arith.constant 0 : i32
    %c0_i32_0 = arith.constant 0 : i32
    %c0_i32_1 = arith.constant 0 : i32
    return %c0_i32, %c0_i32_0 : i32, i32
  }
  func.func @transform_3(%arg0: i32) -> (i32, i32) {
    %c0_i32 = arith.constant 0 : i32
    %c0_i32_0 = arith.constant 0 : i32
    %c0_i32_1 = arith.constant 0 : i32
    return %c0_i32, %c0_i32_0 : i32, i32
  }
}

</mosaic_0001>

<llo_original>
// kernel: dgc_loss_pallas.1
$region0: #{dgc_loss_pallas.1}
  #allocation0 [shape = 'u32[]', space=smem, size = 0x4, offset = 0x4, fixed_abs, tag = 'smem constant byte address 0x4 - core index']
  #allocation1 [shape = 'u32[144,128]{1,0:T(1,128)}', space=vmem, size = 0x12000, scoped, tag = 'internal scratch']
  #allocation2 [shape = 'f32[8,8]{1,0:T(8,128)}', space=vmem, size = 0x1000, scoped, tag = 'scratch operand']
  #allocation3 [shape = 'f32[8,8]{1,0:T(8,128)}', space=vmem, size = 0x1000, scoped, tag = 'scratch operand']
  %s0 = inlined_call_operand.vmem [shape: f32[8,32], index: 0, kind: input, shape index: {}]
  %s1 = inlined_call_operand.vmem [shape: f32[8,1], index: 1, kind: input, shape index: {}]
  %s2 = inlined_call_operand.vmem [shape: f32[1,8], index: 2, kind: input, shape index: {}]
  %s3 = inlined_call_operand.hbm [shape: f32[1,1], index: 3, kind: output, shape index: {}]
  %s4 = sld [smem:[#allocation0]]
  $region22: #{dgc_loss_pallas.1} parent=0
    _
  %s6 = ssub.s32 1, %s4
  %s7 = scalar_select 0, %s6, %s4
  $region1: #{dgc_loss_pallas.1} parent=0
    #allocation4 [shape = 'u8[512]{0}', space=vmem, size = 0x400, scoped, tag = 'output window, operand 0, single buffered']
    #allocation5 [shape = 's32[1]{0}', space=sflag, size = 0x4, scoped, tag = 'scoped memory for dgc_loss_pallas.1']
    %8 = vsyncpa [#allocation5], 0
    // Predicated region
    $region2: #{dgc_loss_pallas.1} parent=1 // pred_check
      _
    $region3: #{dgc_loss_pallas.1} parent=1 // pred_check_branch
      %10 = sbr.rel (0) target = $region5
    $region4: #{dgc_loss_pallas.1} parent=1 // pred_region
      _
    $region5: #{dgc_loss_pallas.1} parent=1 // pred_fallthru
      _
    // Predicated region
    $region6: #{dgc_loss_pallas.1} parent=1 // pred_check
      _
    $region7: #{dgc_loss_pallas.1} parent=1 // pred_check_branch
      %12 = sbr.rel (0) target = $region9
    $region8: #{dgc_loss_pallas.1} parent=1 // pred_region
      _
    $region9: #{dgc_loss_pallas.1} parent=1 // pred_fallthru
      _
    // Predicated region
    $region10: #{dgc_loss_pallas.1} parent=1 // pred_check
      _
    $region11: #{dgc_loss_pallas.1} parent=1 // pred_check_branch
      %14 = sbr.rel (0) target = $region13
    $region12: #{dgc_loss_pallas.1} parent=1 // pred_region
      _
    $region13: #{dgc_loss_pallas.1} parent=1 // pred_fallthru
      _
    %v15 = vld [vmem:[%s0] sm:$0xff]
    %v16 = vmul.f32 %v15, %v15
    %vm17 = vcmask 261120
    %v18 = vsel %vm17, %v16, 0.0
    %19 = vadd.xlane.f32.xlu0 %v18
    %v20 = vpop.xlane.xlu0 %19
    %v21 = vmax.f32 %v20, 1e-16
    %v22 = vrsqrt.pop %v21
    %v23 = vmul.f32 %v15, %v22
    %v25 = vsel %vm17, %v23, 0
    %27 = vmatprep.subr.mxu0 0.0
    %28 = vmatpush1.xpose.msra.mxu0 %v25
    %29 = vmatprep.subr.mxu0 0.0
    %30 = vmatpush1.xpose.msra.mxu0 0.0
    %31 = vmatprep.subr.mxu0 0.0
    %32 = vmatpush1.xpose.msra.mxu0 0.0
    %33 = vmatprep.subr.mxu0 0.0
    %34 = vmatpush1.xpose.msra.mxu0 0.0
    %35 = vmatprep.subr.mxu0 0.0
    %36 = vmatpush1.xpose.msra.mxu0 0.0
    %37 = vmatprep.subr.mxu0 0.0
    %38 = vmatpush1.xpose.msra.mxu0 0.0
    %39 = vmatprep.subr.mxu0 0.0
    %40 = vmatpush1.xpose.msra.mxu0 0.0
    %41 = vmatprep.subr.mxu0 0.0
    %42 = vmatpush1.xpose.msra.mxu0 0.0
    %43 = vmatprep.subr.mxu0 0.0
    %44 = vmatpush1.xpose.msra.mxu0 0.0
    %45 = vmatprep.subr.mxu0 0.0
    %46 = vmatpush1.xpose.msra.mxu0 0.0
    %47 = vmatprep.subr.mxu0 0.0
    %48 = vmatpush1.xpose.msra.mxu0 0.0
    %49 = vmatprep.subr.mxu0 0.0
    %50 = vmatpush1.xpose.msra.mxu0 0.0
    %51 = vmatprep.subr.mxu0 0.0
    %52 = vmatpush1.xpose.msra.mxu0 0.0
    %53 = vmatprep.subr.mxu0 0.0
    %54 = vmatpush1.xpose.msra.mxu0 0.0
    %55 = vmatprep.subr.mxu0 0.0
    %56 = vmatpush1.xpose.msra.mxu0 0.0
    %57 = vmatprep.subr.mxu0 0.0
    %58 = vmatpush1.xpose.msra.mxu0 0.0
    %59 = vmatprep.subr.mxu0 0.0
    %60 = vmatpush1.xpose.msra.mxu0 0.0
    %61 = vmatprep.subr.mxu0 0.0
    %62 = vmatpush1.xpose.msra.mxu0 0.0
    %63 = vmatprep.subr.mxu0 0.0
    %64 = vmatpush1.xpose.msra.mxu0 0.0
    %65 = vmatprep.subr.mxu0 0.0
    %66 = vmatpush1.xpose.msra.mxu0 0.0
    %67 = vmatprep.subr.mxu0 0.0
    %68 = vmatpush1.xpose.msra.mxu0 0.0
    %69 = vmatprep.subr.mxu0 0.0
    %70 = vmatpush1.xpose.msra.mxu0 0.0
    %71 = vmatprep.subr.mxu0 0.0
    %72 = vmatpush1.xpose.msra.mxu0 0.0
    %73 = vmatprep.subr.mxu0 0.0
    %74 = vmatpush1.xpose.msra.mxu0 0.0
    %75 = vmatprep.subr.mxu0 0.0
    %76 = vmatpush1.xpose.msra.mxu0 0.0
    %77 = vmatprep.subr.mxu0 0.0
    %78 = vmatpush1.xpose.msra.mxu0 0.0
    %79 = vmatprep.subr.mxu0 0.0
    %80 = vmatpush1.xpose.msra.mxu0 0.0
    %81 = vmatprep.subr.mxu0 0.0
    %82 = vmatpush1.xpose.msra.mxu0 0.0
    %83 = vmatprep.subr.mxu0 0.0
    %84 = vmatpush1.xpose.msra.mxu0 0.0
    %85 = vmatprep.subr.mxu0 0.0
    %86 = vmatpush1.xpose.msra.mxu0 0.0
    %87 = vmatprep.subr.mxu0 0.0
    %88 = vmatpush1.xpose.msra.mxu0 0.0
    %89 = vmatprep.subr.mxu0 0.0
    %90 = vmatpush1.xpose.msra.mxu0 0.0
    %91 = vmatprep.mubr.f32.mxu0 0.0
    %92 = vmatmul.mubr.f32.gmra.mrb[0].mxu0 %v25
    %v93 = vpop.f32.mrb[0].mxu0
    %v94 = vadd.f32 0.0, %v93
    %v95 = vpop.f32.mrb[0].mxu0
    %96 = vdwg.mxu0
    %v97 = vmul.f32 %v94, 500.0
    %vm98 = vcmask 64512
    %99 = vst.msk [vmem:[#allocation2] sm:$0xff] %vm98, %v97
    %v100 = vld [vmem:[%s1] sm:$0xff]
    %v101 = vld [vmem:[%s2] sm:$0x1]
    %103 = vset.pattern.permute.xlu0 0
    %104 = vperm.xlu0 %103, %v100
    %v105 = vpop.permute.xlu0 %104
    %v108 = vlaneseq
    %v109 = vshrl.u32 %v108, 7
    %v110 = vsub.s32 0, %v109
    %v111 = vrot.slane %v101, %v110
    %v113 = vsub.f32 %v105, %v111
    %v114 = vand.u32 2147483647, %v113
    %v115 = vsub.f32 5.0, %v114
    %v116 = vmax.f32 %v115, 0.0
    %v117 = vmin.f32 %v116, 5.0
    %118 = vst.msk [vmem:[#allocation3] sm:$0xff] %vm98, %v117
    %v119 = vlaneseq
    %v120 = vand.u32 %v119, 127
    %v121 = vlaneseq
    %v122 = vshrl.u32 %v121, 7
    %vm123 = vcmp.lt.s32.totalorder %v122, %v120
    %vm124 = vcmp.eq.s32.totalorder %v120, 0
    %vm125 = vcmp.ne.s32.totalorder %v120, 0
    %vm126 = vcmp.ne.s32.totalorder %v122, 0
    %v127 = vld [vmem:[#allocation2] sm:$0xff]
    %v128 = vld [vmem:[#allocation3] sm:$0xff]
    %v129 = vld [vmem:[#allocation2] sm:$0x1]
    %v130 = vld [vmem:[#allocation3] sm:$0x1]
    %v131 = vsel %vm124, 1, 0
    %vm132 = vcmp.eq.s32.totalorder %v131, 1
    %v133 = vsel %vm132, %v127, 0.0
    %v134 = vsel %vm98, %v133, 0.0
    %135 = vadd.xlane.f32.xlu0 %v134
    %v136 = vpop.xlane.xlu0 %135
    %v137 = vsel %vm132, %v128, 0.0
    %v138 = vsel %vm98, %v137, 0.0
    %139 = vadd.xlane.f32.xlu0 %v138
    %v140 = vpop.xlane.xlu0 %139
    %v141 = vlaneseq
    %v142 = vshrl.u32 %v141, 7
    %v143 = vsub.s32 0, %v142
    %v144 = vrot.slane %v129, %v143
    %v145 = vsub.f32 %v136, %v144
    %v146 = vtanh.pop %v145
    %v147 = vmul.f32 %v146, 0.5
    %v148 = vadd.f32 %v147, 0.5
    %v149 = vsel %vm126, 1, 0
    %vm150 = vcmp.eq.s32.totalorder %v149, 1
    %v151 = vsel %vm150, %v148, 0.0
    %v152 = vsel %vm98, %v151, 0.0
    %v153 = vrot.slane %v152, 4
    %v154 = vadd.f32 %v152, %v153
    %v155 = vrot.slane %v154, 2
    %v156 = vadd.f32 %v154, %v155
    %v157 = vrot.slane %v156, 1
    %v158 = vadd.f32 %v156, %v157
    %v159 = vadd.f32 %v158, 0.5
    %v160 = vadd.f32 %v159, 1.0
    %v161 = vlog2.pop %v160
    %v162 = vmul.f32 %v161, 0.6931472
    %v163 = vmul.f32 %v162, 1.442695
    %v164 = vrcp.pop %v163
    %v165 = vmul.f32 %v163, %v164
    %v166 = vsub.f32 2.0, %v165
    %v167 = vmul.f32 %v164, %v166
    %v168 = vmul.f32 %v130, %v167
    %v169 = vsel %vm125, %v168, 0.0
    %vm170 = vcmask 57344
    %v171 = vsel %vm170, %v169, 0.0
    %172 = vadd.xlane.f32.xlu0 %v171
    %v173 = vpop.xlane.xlu0 %172
    %v174 = vlaneseq
    %v175 = vshrl.u32 %v174, 7
    %v176 = vsub.s32 0, %v175
    %v177 = vrot.slane %v130, %v176
    %vm178 = vcmp.gt.f32.partialorder %v140, %v177
    %vm179 = vcmp.eq.f32.partialorder %v140, %v177
    %vm180 = vmand %vm179, %vm123
    %vm181 = vmor %vm178, %vm180
    %vm182 = vmand %vm181, %vm150
    %v183 = vsel %vm182, 1, 0
    %v184 = vcvt.s32.f32 %v183
    %v185 = vsel %vm98, %v184, 0.0
    %v186 = vrot.slane %v185, 4
    %v187 = vadd.f32 %v185, %v186
    %v188 = vrot.slane %v187, 2
    %v189 = vadd.f32 %v187, %v188
    %v190 = vrot.slane %v189, 1
    %v191 = vadd.f32 %v189, %v190
    %v192 = vadd.f32 %v191, 2.0
    %v193 = vlog2.pop %v192
    %v194 = vmul.f32 %v193, 0.6931472
    %v195 = vmul.f32 %v194, 1.442695
    %v196 = vrcp.pop %v195
    %v197 = vmul.f32 %v195, %v196
    %v198 = vsub.f32 2.0, %v197
    %v199 = vmul.f32 %v196, %v198
    %v200 = vmul.f32 %v130, %v199
    %v201 = vsel %vm125, %v200, 0.0
    %v202 = vsel %vm170, %v201, 0.0
    %203 = vadd.xlane.f32.xlu0 %v202
    %v204 = vpop.xlane.xlu0 %203
    %v205 = vmax.f32 %v204, 1e-30
    %v206 = vrcp.pop %v205
    %v207 = vmul.f32 %v173, %v206
    %v208 = vadd.f32 %v207, 0.0
    %vm209 = vcmp.eq.s32.totalorder %v120, 1
    %vm210 = vcmp.ne.s32.totalorder %v120, 1
    %vm211 = vcmp.ne.s32.totalorder %v122, 1
    %v212 = vld [vmem:[#allocation2 + $0x1] sm:$0x1]
    %v213 = vld [vmem:[#allocation3 + $0x1] sm:$0x1]
    %v214 = vsel %vm209, 1, 0
    %vm215 = vcmp.eq.s32.totalorder %v214, 1
    %v216 = vsel %vm215, %v127, 0.0
    %v217 = vsel %vm98, %v216, 0.0
    %218 = vadd.xlane.f32.xlu0 %v217
    %v219 = vpop.xlane.xlu0 %218
    %v220 = vsel %vm215, %v128, 0.0
    %v221 = vsel %vm98, %v220, 0.0
    %222 = vadd.xlane.f32.xlu0 %v221
    %v223 = vpop.xlane.xlu0 %222
    %v224 = vlaneseq
    %v225 = vshrl.u32 %v224, 7
    %v226 = vsub.s32 0, %v225
    %v227 = vrot.slane %v212, %v226
    %v228 = vsub.f32 %v219, %v227
    %v229 = vtanh.pop %v228
    %v230 = vmul.f32 %v229, 0.5
    %v231 = vadd.f32 %v230, 0.5
    %v232 = vsel %vm211, 1, 0
    %vm233 = vcmp.eq.s32.totalorder %v232, 1
    %v234 = vsel %vm233, %v231, 0.0
    %v235 = vsel %vm98, %v234, 0.0
    %v236 = vrot.slane %v235, 4
    %v237 = vadd.f32 %v235, %v236
    %v238 = vrot.slane %v237, 2
    %v239 = vadd.f32 %v237, %v238
    %v240 = vrot.slane %v239, 1
    %v241 = vadd.f32 %v239, %v240
    %v242 = vadd.f32 %v241, 0.5
    %v243 = vadd.f32 %v242, 1.0
    %v244 = vlog2.pop %v243
    %v245 = vmul.f32 %v244, 0.6931472
    %v246 = vmul.f32 %v245, 1.442695
    %v247 = vrcp.pop %v246
    %v248 = vmul.f32 %v246, %v247
    %v249 = vsub.f32 2.0, %v248
    %v250 = vmul.f32 %v247, %v249
    %v251 = vmul.f32 %v213, %v250
    %v252 = vsel %vm210, %v251, 0.0
    %v253 = vsel %vm170, %v252, 0.0
    %254 = vadd.xlane.f32.xlu0 %v253
    %v255 = vpop.xlane.xlu0 %254
    %v256 = vlaneseq
    %v257 = vshrl.u32 %v256, 7
    %v258 = vsub.s32 0, %v257
    %v259 = vrot.slane %v213, %v258
    %vm260 = vcmp.gt.f32.partialorder %v223, %v259
    %vm261 = vcmp.eq.f32.partialorder %v223, %v259
    %vm262 = vmand %vm261, %vm123
    %vm263 = vmor %vm260, %vm262
    %vm264 = vmand %vm263, %vm233
    %v265 = vsel %vm264, 1, 0
    %v266 = vcvt.s32.f32 %v265
    %v267 = vsel %vm98, %v266, 0.0
    %v268 = vrot.slane %v267, 4
    %v269 = vadd.f32 %v267, %v268
    %v270 = vrot.slane %v269, 2
    %v271 = vadd.f32 %v269, %v270
    %v272 = vrot.slane %v271, 1
    %v273 = vadd.f32 %v271, %v272
    %v274 = vadd.f32 %v273, 2.0
    %v275 = vlog2.pop %v274
    %v276 = vmul.f32 %v275, 0.6931472
    %v277 = vmul.f32 %v276, 1.442695
    %v278 = vrcp.pop %v277
    %v279 = vmul.f32 %v277, %v278
    %v280 = vsub.f32 2.0, %v279
    %v281 = vmul.f32 %v278, %v280
    %v282 = vmul.f32 %v213, %v281
    %v283 = vsel %vm210, %v282, 0.0
    %v284 = vsel %vm170, %v283, 0.0
    %285 = vadd.xlane.f32.xlu0 %v284
    %v286 = vpop.xlane.xlu0 %285
    %v287 = vmax.f32 %v286, 1e-30
    %v288 = vrcp.pop %v287
    %v289 = vmul.f32 %v255, %v288
    %v290 = vadd.f32 %v208, %v289
    %vm291 = vcmp.eq.s32.totalorder %v120, 2
    %vm292 = vcmp.ne.s32.totalorder %v120, 2
    %vm293 = vcmp.ne.s32.totalorder %v122, 2
    %v294 = vld [vmem:[#allocation2 + $0x2] sm:$0x1]
    %v295 = vld [vmem:[#allocation3 + $0x2] sm:$0x1]
    %v296 = vsel %vm291, 1, 0
    %vm297 = vcmp.eq.s32.totalorder %v296, 1
    %v298 = vsel %vm297, %v127, 0.0
    %v299 = vsel %vm98, %v298, 0.0
    %300 = vadd.xlane.f32.xlu0 %v299
    %v301 = vpop.xlane.xlu0 %300
    %v302 = vsel %vm297, %v128, 0.0
    %v303 = vsel %vm98, %v302, 0.0
    %304 = vadd.xlane.f32.xlu0 %v303
    %v305 = vpop.xlane.xlu0 %304
    %v306 = vlaneseq
    %v307 = vshrl.u32 %v306, 7
    %v308 = vsub.s32 0, %v307
    %v309 = vrot.slane %v294, %v308
    %v310 = vsub.f32 %v301, %v309
    %v311 = vtanh.pop %v310
    %v312 = vmul.f32 %v311, 0.5
    %v313 = vadd.f32 %v312, 0.5
    %v314 = vsel %vm293, 1, 0
    %vm315 = vcmp.eq.s32.totalorder %v314, 1
    %v316 = vsel %vm315, %v313, 0.0
    %v317 = vsel %vm98, %v316, 0.0
    %v318 = vrot.slane %v317, 4
    %v319 = vadd.f32 %v317, %v318
    %v320 = vrot.slane %v319, 2
    %v321 = vadd.f32 %v319, %v320
    %v322 = vrot.slane %v321, 1
    %v323 = vadd.f32 %v321, %v322
    %v324 = vadd.f32 %v323, 0.5
    %v325 = vadd.f32 %v324, 1.0
    %v326 = vlog2.pop %v325
    %v327 = vmul.f32 %v326, 0.6931472
    %v328 = vmul.f32 %v327, 1.442695
    %v329 = vrcp.pop %v328
    %v330 = vmul.f32 %v328, %v329
    %v331 = vsub.f32 2.0, %v330
    %v332 = vmul.f32 %v329, %v331
    %v333 = vmul.f32 %v295, %v332
    %v334 = vsel %vm292, %v333, 0.0
    %v335 = vsel %vm170, %v334, 0.0
    %336 = vadd.xlane.f32.xlu0 %v335
    %v337 = vpop.xlane.xlu0 %336
    %v338 = vlaneseq
    %v339 = vshrl.u32 %v338, 7
    %v340 = vsub.s32 0, %v339
    %v341 = vrot.slane %v295, %v340
    %vm342 = vcmp.gt.f32.partialorder %v305, %v341
    %vm343 = vcmp.eq.f32.partialorder %v305, %v341
    %vm344 = vmand %vm343, %vm123
    %vm345 = vmor %vm342, %vm344
    %vm346 = vmand %vm345, %vm315
    %v347 = vsel %vm346, 1, 0
    %v348 = vcvt.s32.f32 %v347
    %v349 = vsel %vm98, %v348, 0.0
    %v350 = vrot.slane %v349, 4
    %v351 = vadd.f32 %v349, %v350
    %v352 = vrot.slane %v351, 2
    %v353 = vadd.f32 %v351, %v352
    %v354 = vrot.slane %v353, 1
    %v355 = vadd.f32 %v353, %v354
    %v356 = vadd.f32 %v355, 2.0
    %v357 = vlog2.pop %v356
    %v358 = vmul.f32 %v357, 0.6931472
    %v359 = vmul.f32 %v358, 1.442695
    %v360 = vrcp.pop %v359
    %v361 = vmul.f32 %v359, %v360
    %v362 = vsub.f32 2.0, %v361
    %v363 = vmul.f32 %v360, %v362
    %v364 = vmul.f32 %v295, %v363
    %v365 = vsel %vm292, %v364, 0.0
    %v366 = vsel %vm170, %v365, 0.0
    %367 = vadd.xlane.f32.xlu0 %v366
    %v368 = vpop.xlane.xlu0 %367
    %v369 = vmax.f32 %v368, 1e-30
    %v370 = vrcp.pop %v369
    %v371 = vmul.f32 %v337, %v370
    %v372 = vadd.f32 %v290, %v371
    %vm373 = vcmp.eq.s32.totalorder %v120, 3
    %vm374 = vcmp.ne.s32.totalorder %v120, 3
    %vm375 = vcmp.ne.s32.totalorder %v122, 3
    %v376 = vld [vmem:[#allocation2 + $0x3] sm:$0x1]
    %v377 = vld [vmem:[#allocation3 + $0x3] sm:$0x1]
    %v378 = vsel %vm373, 1, 0
    %vm379 = vcmp.eq.s32.totalorder %v378, 1
    %v380 = vsel %vm379, %v127, 0.0
    %v381 = vsel %vm98, %v380, 0.0
    %382 = vadd.xlane.f32.xlu0 %v381
    %v383 = vpop.xlane.xlu0 %382
    %v384 = vsel %vm379, %v128, 0.0
    %v385 = vsel %vm98, %v384, 0.0
    %386 = vadd.xlane.f32.xlu0 %v385
    %v387 = vpop.xlane.xlu0 %386
    %v388 = vlaneseq
    %v389 = vshrl.u32 %v388, 7
    %v390 = vsub.s32 0, %v389
    %v391 = vrot.slane %v376, %v390
    %v392 = vsub.f32 %v383, %v391
    %v393 = vtanh.pop %v392
    %v394 = vmul.f32 %v393, 0.5
    %v395 = vadd.f32 %v394, 0.5
    %v396 = vsel %vm375, 1, 0
    %vm397 = vcmp.eq.s32.totalorder %v396, 1
    %v398 = vsel %vm397, %v395, 0.0
    %v399 = vsel %vm98, %v398, 0.0
    %v400 = vrot.slane %v399, 4
    %v401 = vadd.f32 %v399, %v400
    %v402 = vrot.slane %v401, 2
    %v403 = vadd.f32 %v401, %v402
    %v404 = vrot.slane %v403, 1
    %v405 = vadd.f32 %v403, %v404
    %v406 = vadd.f32 %v405, 0.5
    %v407 = vadd.f32 %v406, 1.0
    %v408 = vlog2.pop %v407
    %v409 = vmul.f32 %v408, 0.6931472
    %v410 = vmul.f32 %v409, 1.442695
    %v411 = vrcp.pop %v410
    %v412 = vmul.f32 %v410, %v411
    %v413 = vsub.f32 2.0, %v412
    %v414 = vmul.f32 %v411, %v413
    %v415 = vmul.f32 %v377, %v414
    %v416 = vsel %vm374, %v415, 0.0
    %v417 = vsel %vm170, %v416, 0.0
    %418 = vadd.xlane.f32.xlu0 %v417
    %v419 = vpop.xlane.xlu0 %418
    %v420 = vlaneseq
    %v421 = vshrl.u32 %v420, 7
    %v422 = vsub.s32 0, %v421
    %v423 = vrot.slane %v377, %v422
    %vm424 = vcmp.gt.f32.partialorder %v387, %v423
    %vm425 = vcmp.eq.f32.partialorder %v387, %v423
    %vm426 = vmand %vm425, %vm123
    %vm427 = vmor %vm424, %vm426
    %vm428 = vmand %vm427, %vm397
    %v429 = vsel %vm428, 1, 0
    %v430 = vcvt.s32.f32 %v429
    %v431 = vsel %vm98, %v430, 0.0
    %v432 = vrot.slane %v431, 4
    %v433 = vadd.f32 %v431, %v432
    %v434 = vrot.slane %v433, 2
    %v435 = vadd.f32 %v433, %v434
    %v436 = vrot.slane %v435, 1
    %v437 = vadd.f32 %v435, %v436
    %v438 = vadd.f32 %v437, 2.0
    %v439 = vlog2.pop %v438
    %v440 = vmul.f32 %v439, 0.6931472
    %v441 = vmul.f32 %v440, 1.442695
    %v442 = vrcp.pop %v441
    %v443 = vmul.f32 %v441, %v442
    %v444 = vsub.f32 2.0, %v443
    %v445 = vmul.f32 %v442, %v444
    %v446 = vmul.f32 %v377, %v445
    %v447 = vsel %vm374, %v446, 0.0
    %v448 = vsel %vm170, %v447, 0.0
    %449 = vadd.xlane.f32.xlu0 %v448
    %v450 = vpop.xlane.xlu0 %449
    %v451 = vmax.f32 %v450, 1e-30
    %v452 = vrcp.pop %v451
    %v453 = vmul.f32 %v419, %v452
    %v454 = vadd.f32 %v372, %v453
    %vm455 = vcmp.eq.s32.totalorder %v120, 4
    %vm456 = vcmp.ne.s32.totalorder %v120, 4
    %vm457 = vcmp.ne.s32.totalorder %v122, 4
    %v458 = vld [vmem:[#allocation2 + $0x4] sm:$0x1]
    %v459 = vld [vmem:[#allocation3 + $0x4] sm:$0x1]
    %v460 = vsel %vm455, 1, 0
    %vm461 = vcmp.eq.s32.totalorder %v460, 1
    %v462 = vsel %vm461, %v127, 0.0
    %v463 = vsel %vm98, %v462, 0.0
    %464 = vadd.xlane.f32.xlu0 %v463
    %v465 = vpop.xlane.xlu0 %464
    %v466 = vsel %vm461, %v128, 0.0
    %v467 = vsel %vm98, %v466, 0.0
    %468 = vadd.xlane.f32.xlu0 %v467
    %v469 = vpop.xlane.xlu0 %468
    %v470 = vlaneseq
    %v471 = vshrl.u32 %v470, 7
    %v472 = vsub.s32 0, %v471
    %v473 = vrot.slane %v458, %v472
    %v474 = vsub.f32 %v465, %v473
    %v475 = vtanh.pop %v474
    %v476 = vmul.f32 %v475, 0.5
    %v477 = vadd.f32 %v476, 0.5
    %v478 = vsel %vm457, 1, 0
    %vm479 = vcmp.eq.s32.totalorder %v478, 1
    %v480 = vsel %vm479, %v477, 0.0
    %v481 = vsel %vm98, %v480, 0.0
    %v482 = vrot.slane %v481, 4
    %v483 = vadd.f32 %v481, %v482
    %v484 = vrot.slane %v483, 2
    %v485 = vadd.f32 %v483, %v484
    %v486 = vrot.slane %v485, 1
    %v487 = vadd.f32 %v485, %v486
    %v488 = vadd.f32 %v487, 0.5
    %v489 = vadd.f32 %v488, 1.0
    %v490 = vlog2.pop %v489
    %v491 = vmul.f32 %v490, 0.6931472
    %v492 = vmul.f32 %v491, 1.442695
    %v493 = vrcp.pop %v492
    %v494 = vmul.f32 %v492, %v493
    %v495 = vsub.f32 2.0, %v494
    %v496 = vmul.f32 %v493, %v495
    %v497 = vmul.f32 %v459, %v496
    %v498 = vsel %vm456, %v497, 0.0
    %v499 = vsel %vm170, %v498, 0.0
    %500 = vadd.xlane.f32.xlu0 %v499
    %v501 = vpop.xlane.xlu0 %500
    %v502 = vlaneseq
    %v503 = vshrl.u32 %v502, 7
    %v504 = vsub.s32 0, %v503
    %v505 = vrot.slane %v459, %v504
    %vm506 = vcmp.gt.f32.partialorder %v469, %v505
    %vm507 = vcmp.eq.f32.partialorder %v469, %v505
    %vm508 = vmand %vm507, %vm123
    %vm509 = vmor %vm506, %vm508
    %vm510 = vmand %vm509, %vm479
    %v511 = vsel %vm510, 1, 0
    %v512 = vcvt.s32.f32 %v511
    %v513 = vsel %vm98, %v512, 0.0
    %v514 = vrot.slane %v513, 4
    %v515 = vadd.f32 %v513, %v514
    %v516 = vrot.slane %v515, 2
    %v517 = vadd.f32 %v515, %v516
    %v518 = vrot.slane %v517, 1
    %v519 = vadd.f32 %v517, %v518
    %v520 = vadd.f32 %v519, 2.0
    %v521 = vlog2.pop %v520
    %v522 = vmul.f32 %v521, 0.6931472
    %v523 = vmul.f32 %v522, 1.442695
    %v524 = vrcp.pop %v523
    %v525 = vmul.f32 %v523, %v524
    %v526 = vsub.f32 2.0, %v525
    %v527 = vmul.f32 %v524, %v526
    %v528 = vmul.f32 %v459, %v527
    %v529 = vsel %vm456, %v528, 0.0
    %v530 = vsel %vm170, %v529, 0.0
    %531 = vadd.xlane.f32.xlu0 %v530
    %v532 = vpop.xlane.xlu0 %531
    %v533 = vmax.f32 %v532, 1e-30
    %v534 = vrcp.pop %v533
    %v535 = vmul.f32 %v501, %v534
    %v536 = vadd.f32 %v454, %v535
    %vm537 = vcmp.eq.s32.totalorder %v120, 5
    %vm538 = vcmp.ne.s32.totalorder %v120, 5
    %vm539 = vcmp.ne.s32.totalorder %v122, 5
    %v540 = vld [vmem:[#allocation2 + $0x5] sm:$0x1]
    %v541 = vld [vmem:[#allocation3 + $0x5] sm:$0x1]
    %v542 = vsel %vm537, 1, 0
    %vm543 = vcmp.eq.s32.totalorder %v542, 1
    %v544 = vsel %vm543, %v127, 0.0
    %v545 = vsel %vm98, %v544, 0.0
    %546 = vadd.xlane.f32.xlu0 %v545
    %v547 = vpop.xlane.xlu0 %546
    %v548 = vsel %vm543, %v128, 0.0
    %v549 = vsel %vm98, %v548, 0.0
    %550 = vadd.xlane.f32.xlu0 %v549
    %v551 = vpop.xlane.xlu0 %550
    %v552 = vlaneseq
    %v553 = vshrl.u32 %v552, 7
    %v554 = vsub.s32 0, %v553
    %v555 = vrot.slane %v540, %v554
    %v556 = vsub.f32 %v547, %v555
    %v557 = vtanh.pop %v556
    %v558 = vmul.f32 %v557, 0.5
    %v559 = vadd.f32 %v558, 0.5
    %v560 = vsel %vm539, 1, 0
    %vm561 = vcmp.eq.s32.totalorder %v560, 1
    %v562 = vsel %vm561, %v559, 0.0
    %v563 = vsel %vm98, %v562, 0.0
    %v564 = vrot.slane %v563, 4
    %v565 = vadd.f32 %v563, %v564
    %v566 = vrot.slane %v565, 2
    %v567 = vadd.f32 %v565, %v566
    %v568 = vrot.slane %v567, 1
    %v569 = vadd.f32 %v567, %v568
    %v570 = vadd.f32 %v569, 0.5
    %v571 = vadd.f32 %v570, 1.0
    %v572 = vlog2.pop %v571
    %v573 = vmul.f32 %v572, 0.6931472
    %v574 = vmul.f32 %v573, 1.442695
    %v575 = vrcp.pop %v574
    %v576 = vmul.f32 %v574, %v575
    %v577 = vsub.f32 2.0, %v576
    %v578 = vmul.f32 %v575, %v577
    %v579 = vmul.f32 %v541, %v578
    %v580 = vsel %vm538, %v579, 0.0
    %v581 = vsel %vm170, %v580, 0.0
    %582 = vadd.xlane.f32.xlu0 %v581
    %v583 = vpop.xlane.xlu0 %582
    %v584 = vlaneseq
    %v585 = vshrl.u32 %v584, 7
    %v586 = vsub.s32 0, %v585
    %v587 = vrot.slane %v541, %v586
    %vm588 = vcmp.gt.f32.partialorder %v551, %v587
    %vm589 = vcmp.eq.f32.partialorder %v551, %v587
    %vm590 = vmand %vm589, %vm123
    %vm591 = vmor %vm588, %vm590
    %vm592 = vmand %vm591, %vm561
    %v593 = vsel %vm592, 1, 0
    %v594 = vcvt.s32.f32 %v593
    %v595 = vsel %vm98, %v594, 0.0
    %v596 = vrot.slane %v595, 4
    %v597 = vadd.f32 %v595, %v596
    %v598 = vrot.slane %v597, 2
    %v599 = vadd.f32 %v597, %v598
    %v600 = vrot.slane %v599, 1
    %v601 = vadd.f32 %v599, %v600
    %v602 = vadd.f32 %v601, 2.0
    %v603 = vlog2.pop %v602
    %v604 = vmul.f32 %v603, 0.6931472
    %v605 = vmul.f32 %v604, 1.442695
    %v606 = vrcp.pop %v605
    %v607 = vmul.f32 %v605, %v606
    %v608 = vsub.f32 2.0, %v607
    %v609 = vmul.f32 %v606, %v608
    %v610 = vmul.f32 %v541, %v609
    %v611 = vsel %vm538, %v610, 0.0
    %v612 = vsel %vm170, %v611, 0.0
    %613 = vadd.xlane.f32.xlu0 %v612
    %v614 = vpop.xlane.xlu0 %613
    %v615 = vmax.f32 %v614, 1e-30
    %v616 = vrcp.pop %v615
    %v617 = vmul.f32 %v583, %v616
    %v618 = vadd.f32 %v536, %v617
    %vm619 = vcmp.eq.s32.totalorder %v120, 6
    %vm620 = vcmp.ne.s32.totalorder %v120, 6
    %vm621 = vcmp.ne.s32.totalorder %v122, 6
    %v622 = vld [vmem:[#allocation2 + $0x6] sm:$0x1]
    %v623 = vld [vmem:[#allocation3 + $0x6] sm:$0x1]
    %v624 = vsel %vm619, 1, 0
    %vm625 = vcmp.eq.s32.totalorder %v624, 1
    %v626 = vsel %vm625, %v127, 0.0
    %v627 = vsel %vm98, %v626, 0.0
    %628 = vadd.xlane.f32.xlu0 %v627
    %v629 = vpop.xlane.xlu0 %628
    %v630 = vsel %vm625, %v128, 0.0
    %v631 = vsel %vm98, %v630, 0.0
    %632 = vadd.xlane.f32.xlu0 %v631
    %v633 = vpop.xlane.xlu0 %632
    %v634 = vlaneseq
    %v635 = vshrl.u32 %v634, 7
    %v636 = vsub.s32 0, %v635
    %v637 = vrot.slane %v622, %v636
    %v638 = vsub.f32 %v629, %v637
    %v639 = vtanh.pop %v638
    %v640 = vmul.f32 %v639, 0.5
    %v641 = vadd.f32 %v640, 0.5
    %v642 = vsel %vm621, 1, 0
    %vm643 = vcmp.eq.s32.totalorder %v642, 1
    %v644 = vsel %vm643, %v641, 0.0
    %v645 = vsel %vm98, %v644, 0.0
    %v646 = vrot.slane %v645, 4
    %v647 = vadd.f32 %v645, %v646
    %v648 = vrot.slane %v647, 2
    %v649 = vadd.f32 %v647, %v648
    %v650 = vrot.slane %v649, 1
    %v651 = vadd.f32 %v649, %v650
    %v652 = vadd.f32 %v651, 0.5
    %v653 = vadd.f32 %v652, 1.0
    %v654 = vlog2.pop %v653
    %v655 = vmul.f32 %v654, 0.6931472
    %v656 = vmul.f32 %v655, 1.442695
    %v657 = vrcp.pop %v656
    %v658 = vmul.f32 %v656, %v657
    %v659 = vsub.f32 2.0, %v658
    %v660 = vmul.f32 %v657, %v659
    %v661 = vmul.f32 %v623, %v660
    %v662 = vsel %vm620, %v661, 0.0
    %v663 = vsel %vm170, %v662, 0.0
    %664 = vadd.xlane.f32.xlu0 %v663
    %v665 = vpop.xlane.xlu0 %664
    %v666 = vlaneseq
    %v667 = vshrl.u32 %v666, 7
    %v668 = vsub.s32 0, %v667
    %v669 = vrot.slane %v623, %v668
    %vm670 = vcmp.gt.f32.partialorder %v633, %v669
    %vm671 = vcmp.eq.f32.partialorder %v633, %v669
    %vm672 = vmand %vm671, %vm123
    %vm673 = vmor %vm670, %vm672
    %vm674 = vmand %vm673, %vm643
    %v675 = vsel %vm674, 1, 0
    %v676 = vcvt.s32.f32 %v675
    %v677 = vsel %vm98, %v676, 0.0
    %v678 = vrot.slane %v677, 4
    %v679 = vadd.f32 %v677, %v678
    %v680 = vrot.slane %v679, 2
    %v681 = vadd.f32 %v679, %v680
    %v682 = vrot.slane %v681, 1
    %v683 = vadd.f32 %v681, %v682
    %v684 = vadd.f32 %v683, 2.0
    %v685 = vlog2.pop %v684
    %v686 = vmul.f32 %v685, 0.6931472
    %v687 = vmul.f32 %v686, 1.442695
    %v688 = vrcp.pop %v687
    %v689 = vmul.f32 %v687, %v688
    %v690 = vsub.f32 2.0, %v689
    %v691 = vmul.f32 %v688, %v690
    %v692 = vmul.f32 %v623, %v691
    %v693 = vsel %vm620, %v692, 0.0
    %v694 = vsel %vm170, %v693, 0.0
    %695 = vadd.xlane.f32.xlu0 %v694
    %v696 = vpop.xlane.xlu0 %695
    %v697 = vmax.f32 %v696, 1e-30
    %v698 = vrcp.pop %v697
    %v699 = vmul.f32 %v665, %v698
    %v700 = vadd.f32 %v618, %v699
    %vm701 = vcmp.eq.s32.totalorder %v120, 7
    %vm702 = vcmp.ne.s32.totalorder %v120, 7
    %vm703 = vcmp.ne.s32.totalorder %v122, 7
    %v704 = vld [vmem:[#allocation2 + $0x7] sm:$0x1]
    %v705 = vld [vmem:[#allocation3 + $0x7] sm:$0x1]
    %v706 = vsel %vm701, 1, 0
    %vm707 = vcmp.eq.s32.totalorder %v706, 1
    %v708 = vsel %vm707, %v127, 0.0
    %v709 = vsel %vm98, %v708, 0.0
    %710 = vadd.xlane.f32.xlu0 %v709
    %v711 = vpop.xlane.xlu0 %710
    %v712 = vsel %vm707, %v128, 0.0
    %v713 = vsel %vm98, %v712, 0.0
    %714 = vadd.xlane.f32.xlu0 %v713
    %v715 = vpop.xlane.xlu0 %714
    %v716 = vlaneseq
    %v717 = vshrl.u32 %v716, 7
    %v718 = vsub.s32 0, %v717
    %v719 = vrot.slane %v704, %v718
    %v720 = vsub.f32 %v711, %v719
    %v721 = vtanh.pop %v720
    %v722 = vmul.f32 %v721, 0.5
    %v723 = vadd.f32 %v722, 0.5
    %v724 = vsel %vm703, 1, 0
    %vm725 = vcmp.eq.s32.totalorder %v724, 1
    %v726 = vsel %vm725, %v723, 0.0
    %v727 = vsel %vm98, %v726, 0.0
    %v728 = vrot.slane %v727, 4
    %v729 = vadd.f32 %v727, %v728
    %v730 = vrot.slane %v729, 2
    %v731 = vadd.f32 %v729, %v730
    %v732 = vrot.slane %v731, 1
    %v733 = vadd.f32 %v731, %v732
    %v734 = vadd.f32 %v733, 0.5
    %v735 = vadd.f32 %v734, 1.0
    %v736 = vlog2.pop %v735
    %v737 = vmul.f32 %v736, 0.6931472
    %v738 = vmul.f32 %v737, 1.442695
    %v739 = vrcp.pop %v738
    %v740 = vmul.f32 %v738, %v739
    %v741 = vsub.f32 2.0, %v740
    %v742 = vmul.f32 %v739, %v741
    %v743 = vmul.f32 %v705, %v742
    %v744 = vsel %vm702, %v743, 0.0
    %v745 = vsel %vm170, %v744, 0.0
    %746 = vadd.xlane.f32.xlu0 %v745
    %v747 = vpop.xlane.xlu0 %746
    %v748 = vlaneseq
    %v749 = vshrl.u32 %v748, 7
    %v750 = vsub.s32 0, %v749
    %v751 = vrot.slane %v705, %v750
    %vm752 = vcmp.gt.f32.partialorder %v715, %v751
    %vm753 = vcmp.eq.f32.partialorder %v715, %v751
    %vm754 = vmand %vm753, %vm123
    %vm755 = vmor %vm752, %vm754
    %vm756 = vmand %vm755, %vm725
    %v757 = vsel %vm756, 1, 0
    %v758 = vcvt.s32.f32 %v757
    %v759 = vsel %vm98, %v758, 0.0
    %v760 = vrot.slane %v759, 4
    %v761 = vadd.f32 %v759, %v760
    %v762 = vrot.slane %v761, 2
    %v763 = vadd.f32 %v761, %v762
    %v764 = vrot.slane %v763, 1
    %v765 = vadd.f32 %v763, %v764
    %v766 = vadd.f32 %v765, 2.0
    %v767 = vlog2.pop %v766
    %v768 = vmul.f32 %v767, 0.6931472
    %v769 = vmul.f32 %v768, 1.442695
    %v770 = vrcp.pop %v769
    %v771 = vmul.f32 %v769, %v770
    %v772 = vsub.f32 2.0, %v771
    %v773 = vmul.f32 %v770, %v772
    %v774 = vmul.f32 %v705, %v773
    %v775 = vsel %vm702, %v774, 0.0
    %v776 = vsel %vm170, %v775, 0.0
    %777 = vadd.xlane.f32.xlu0 %v776
    %v778 = vpop.xlane.xlu0 %777
    %v779 = vmax.f32 %v778, 1e-30
    %v780 = vrcp.pop %v779
    %v781 = vmul.f32 %v747, %v780
    %v782 = vadd.f32 %v700, %v781
    %v783 = vrcp.pop 8.0
    %v784 = vmul.f32 %v782, %v783
    %v785 = vsub.f32 1.0, %v784
    %vm786 = vcmask 0
    %787 = vst.msk [vmem:[#allocation4] sm:$0x1] %vm786, %v785
    // Predicated region
    $region14: #{dgc_loss_pallas.1} parent=1 // pred_check
      _
    $region15: #{dgc_loss_pallas.1} parent=1 // pred_check_branch
      %789 = sbr.rel (0) target = $region17
    $region16: #{dgc_loss_pallas.1} parent=1 // pred_region
      %s791 = ssub.s32 16, 16
      %792 = vsyncadd [#allocation5], %s791
      %s794 = sshll.u32 [#allocation4], 4
      %s795 = int_to_ptr.vmem [resolvable:$true] %s794
      %797 = dma.vmem_to_hbm [thread:$0]  %s795, 16, %s3, [#allocation5]
    $region17: #{dgc_loss_pallas.1} parent=1 // pred_fallthru
      _
    // Predicated region
    $region18: #{dgc_loss_pallas.1} parent=1 // pred_check
      _
    $region19: #{dgc_loss_pallas.1} parent=1 // pred_check_branch
      %799 = sbr.rel (0) target = $region21
    $region20: #{dgc_loss_pallas.1} parent=1 // pred_region
      %800 = dma.done [#allocation5], 16
    $region21: #{dgc_loss_pallas.1} parent=1 // pred_fallthru
      _
    %801 = vsyncpa [#allocation5], 1

</llo_original>
